<compile_context>
chip_gen: v7x
topology: tpu7x:2x2x1
jax: 0.10.0
libtpu: 0.0.40
codegen_flags: <defaults>
</compile_context>

<pallas_src>
import jax
import jax.numpy as jnp
from jax.experimental import pallas as pl
from jax.experimental.pallas import tpu as pltpu


def _round_up(x, m):
    return (x + m - 1) // m * m


def _lstm_actor_rollout_kernel(x_ref, h0_ref, c0_ref, w_cat_ref, b_ref,
                               w_fc_ref, b_fc_ref,
                               logits_ref, probs_ref, h_out_ref, c_out_ref,
                               xh_ref, h_scr, c_scr):
    t = pl.program_id(0)
    T = pl.num_programs(0)
    B, H = h_scr.shape
    D = x_ref.shape[-1]
    Kp = xh_ref.shape[-1]

    @pl.when(t == 0)
    def _():
        # Load the initial recurrent state and zero the packed-input pad tail once
        # (scratch persists across grid steps, so this never runs again).
        h_scr[...] = h0_ref[...]
        c_scr[...] = c0_ref[...]
        if H + D != Kp:
            xh_ref[:, H + D:] = jnp.zeros((B, Kp - (H + D)), xh_ref.dtype)

    # Pack [h | x | pad] so both gate matmuls fuse into ONE MXU dot against
    # [W_hh.T ; W_ih.T ; 0].  h slot is lane-aligned at offset 0 (H = 128).
    xh_ref[:, :H] = h_scr[...].astype(xh_ref.dtype)
    xh_ref[:, H:H + D] = x_ref[...].astype(xh_ref.dtype)

    # One LSTM step, PyTorch gate order i, f, g, o.  Folded bias, f32 accumulate.
    gates = jnp.dot(xh_ref[...], w_cat_ref[...],
                    preferred_element_type=jnp.float32) + b_ref[...]      # (B, 4H)

    # H == 128 -> each gate is a lane-aligned 128-lane block: sigmoid once
    # full-width, tanh only on the g slice (no iota mask / select needed).
    sig = jax.nn.sigmoid(gates)
    i_g = sig[:, 0 * H:1 * H]
    f_g = sig[:, 1 * H:2 * H]
    g_g = jnp.tanh(gates[:, 2 * H:3 * H])
    o_g = sig[:, 3 * H:4 * H]

    c_new = f_g * c_scr[...] + i_g * g_g
    h_new = o_g * jnp.tanh(c_new)
    h_scr[...] = c_new * 0.0 + h_new if False else h_new   # keep carries in f32
    h_scr[...] = h_new
    c_scr[...] = c_new

    # fc head + fused softmax only on the last step (module uses lstm_out[:, -1, :]).
    @pl.when(t == T - 1)
    def _():
        logits = jnp.dot(h_new.astype(w_fc_ref.dtype), w_fc_ref[...],
                         preferred_element_type=jnp.float32) + b_fc_ref[...]   # (B, Ap)
        m = jnp.max(logits, axis=-1, keepdims=True)
        e = jnp.exp(logits - m)                      # pad lanes: exp(-1e30 - m) == 0
        denom = jnp.sum(e, axis=-1, keepdims=True)
        if jnp.dtype(w_fc_ref.dtype) == jnp.dtype(jnp.float32):
            probs = e / denom                        # exact: keeps the 1e-4 f32 check
        else:
            probs = e * pl.reciprocal(denom, approx=True)   # EUP vrcp, idle slot
        logits_ref[...] = logits
        probs_ref[...] = probs
        h_out_ref[...] = h_new
        c_out_ref[...] = c_new


def init_params(key, state_dim=500, action_dim=10, hidden_size=128):
    """PyTorch-layout synthetic params, U(-1/sqrt(H), 1/sqrt(H))."""
    bound = 1.0 / (hidden_size ** 0.5)
    ks = jax.random.split(key, 6)
    u = lambda k, shape: jax.random.uniform(k, shape, jnp.float32, -bound, bound)
    return dict(
        w_ih=u(ks[0], (4 * hidden_size, state_dim)),    # nn.LSTM weight_ih_l0
        w_hh=u(ks[1], (4 * hidden_size, hidden_size)),  # nn.LSTM weight_hh_l0
        b_ih=u(ks[2], (4 * hidden_size,)),
        b_hh=u(ks[3], (4 * hidden_size,)),
        w_fc=u(ks[4], (action_dim, hidden_size)),       # nn.Linear weight
        b_fc=u(ks[5], (action_dim,)),
    )


def pack_params(params, compute_dtype=jnp.bfloat16):
    """Kernel-ready arrays: fused [W_hh.T ; W_ih.T ; 0] gate weight, folded bias,
    lane-dense fc.  compute_dtype=bf16 halves weight DMA (f32 path kept for tests)."""
    w_ih, w_hh = params["w_ih"], params["w_hh"]
    four_h, D = w_ih.shape
    H = four_h // 4
    A = params["w_fc"].shape[0]
    Kp = _round_up(H + D, 128)
    Ap = _round_up(A, 128)

    w_cat = jnp.zeros((Kp, 4 * H), jnp.float32)
    w_cat = w_cat.at[:H].set(w_hh.T)             # h rows first (lane-aligned slot)
    w_cat = w_cat.at[H:H + D].set(w_ih.T)        # x rows; tail pad rows stay 0
    bias = (params["b_ih"] + params["b_hh"]).reshape(1, 4 * H).astype(jnp.float32)

    w_fc = jnp.zeros((H, Ap), jnp.float32).at[:, :A].set(params["w_fc"].T)
    b_fc = jnp.full((1, Ap), -1e30, jnp.float32).at[0, :A].set(params["b_fc"])

    return dict(w_cat=w_cat.astype(compute_dtype), bias=bias,
                w_fc=w_fc.astype(compute_dtype), b_fc=b_fc,
                dims=(D, Kp, H, A, Ap))


def lstm_actor_rollout(packed, states, hidden=None):
    """Run T LSTM steps in ONE pallas_call (weights stay VMEM-resident).
    states: (B, T, D), batch_first like the module.  Returns
    ((logits, probs) of the LAST step, (h, c)) with h/c in PyTorch shape (1, B, H).
    TODO(synk): torch.distributions.Categorical has no Pallas equivalent; logits +
    softmax probs stand in for the distribution object."""
    D, Kp, H, A, Ap = packed["dims"]
    B, T, _ = states.shape
    cdt = packed["w_cat"].dtype

    if hidden is None:
        h0 = jnp.zeros((1, B, H), jnp.float32)
        c0 = jnp.zeros((1, B, H), jnp.float32)
    else:
        h0, c0 = hidden

    # Time-major so each per-step x block is a contiguous (1, B, D) HBM slab.
    states_tm = jnp.transpose(states, (1, 0, 2)).astype(jnp.float32)

    grid_spec = pltpu.PrefetchScalarGridSpec(
        num_scalar_prefetch=0,
        grid=(T,),
        in_specs=[
            pl.BlockSpec((None, B, D), lambda t: (t, 0, 0)),    # x_t (per step)
            pl.BlockSpec((B, H), lambda t: (0, 0)),             # h0
            pl.BlockSpec((B, H), lambda t: (0, 0)),             # c0
            pl.BlockSpec((Kp, 4 * H), lambda t: (0, 0)),        # w_cat  (resident)
            pl.BlockSpec((1, 4 * H), lambda t: (0, 0)),         # folded bias
            pl.BlockSpec((H, Ap), lambda t: (0, 0)),            # w_fc   (resident)
            pl.BlockSpec((1, Ap), lambda t: (0, 0)),            # b_fc
        ],
        out_specs=(
            pl.BlockSpec((B, Ap), lambda t: (0, 0)),            # logits (lane-dense)
            pl.BlockSpec((B, Ap), lambda t: (0, 0)),            # probs  (lane-dense)
            pl.BlockSpec((B, H), lambda t: (0, 0)),             # h_T
            pl.BlockSpec((B, H), lambda t: (0, 0)),             # c_T
        ),
        scratch_shapes=[
            pltpu.VMEM((B, Kp), cdt),            # packed [h | x | pad]
            pltpu.VMEM((B, H), jnp.float32),     # h carry (kept in f32)
            pltpu.VMEM((B, H), jnp.float32),     # c carry (kept in f32)
        ],
    )

    logits_p, probs_p, h_new, c_new = pl.pallas_call(
        _lstm_actor_rollout_kernel,
        out_shape=(jax.ShapeDtypeStruct((B, Ap), jnp.float32),
                   jax.ShapeDtypeStruct((B, Ap), jnp.float32),
                   jax.ShapeDtypeStruct((B, H), jnp.float32),
                   jax.ShapeDtypeStruct((B, H), jnp.float32)),
        grid_spec=grid_spec,
        compiler_params=pltpu.CompilerParams(
            dimension_semantics=("arbitrary",)),   # time carries h/c -> sequential
    )(states_tm, h0[0], c0[0],
      packed["w_cat"], packed["bias"], packed["w_fc"], packed["b_fc"])

    return (logits_p[:, :A], probs_p[:, :A]), (h_new[None, ...], c_new[None, ...])


def lstm_actor_forward(packed, state, hidden=None):
    """Exactly LSTMActor.forward: a single step on state (B, D) (= T == 1)."""
    return lstm_actor_rollout(packed, state[:, None, :], hidden)


# ------------------------- pure-JAX reference (f32) -------------------------

def _reference_step(params, x, h, c):
    gates = (x @ params["w_ih"].T + h @ params["w_hh"].T
             + params["b_ih"] + params["b_hh"])
    i_g, f_g, g_g, o_g = jnp.split(gates, 4, axis=-1)
    i_g, f_g, o_g = jax.nn.sigmoid(i_g), jax.nn.sigmoid(f_g), jax.nn.sigmoid(o_g)
    g_g = jnp.tanh(g_g)
    c_new = f_g * c + i_g * g_g
    h_new = o_g * jnp.tanh(c_new)
    return h_new, c_new


def _reference_rollout(params, states, h, c):
    for t in range(states.shape[1]):
        h, c = _reference_step(params, states[:, t, :], h, c)
    logits = h @ params["w_fc"].T + params["b_fc"]
    return logits, jax.nn.softmax(logits, axis=-1), h, c


if __name__ == "__main__":
    key = jax.random.PRNGKey(0)
    pkey, xkey, skey, hkey, ckey = jax.random.split(key, 5)

    B, T, STATE_DIM, ACTION_DIM, HIDDEN = 2, 8, 500, 10, 128   # module defaults
    params = init_params(pkey, STATE_DIM, ACTION_DIM, HIDDEN)
    state = jax.random.normal(xkey, (B, STATE_DIM), jnp.float32)
    states = jax.random.normal(skey, (B, T, STATE_DIM), jnp.float32)
    h0 = jax.random.normal(hkey, (1, B, HIDDEN), jnp.float32)
    c0 = jax.random.normal(ckey, (1, B, HIDDEN), jnp.float32)
    zeros = jnp.zeros((B, HIDDEN), jnp.float32)

    # ---- f32 weight path: bit-faithful to the module, tight tolerance ----
    packed_f32 = pack_params(params, compute_dtype=jnp.float32)
    tol = dict(atol=1e-4, rtol=1e-4)

    (lg, pr), (h1, c1) = lstm_actor_forward(packed_f32, state)          # hidden=None
    jax.block_until_ready((lg, pr, h1, c1))
    rl, rp, rh, rc = _reference_rollout(params, state[:, None, :], zeros, zeros)
    assert lg.shape == (B, ACTION_DIM) and pr.shape == (B, ACTION_DIM)
    assert h1.shape == (1, B, HIDDEN) and c1.shape == (1, B, HIDDEN)
    assert jnp.allclose(lg, rl, **tol) and jnp.allclose(pr, rp, **tol)
    assert jnp.allclose(h1[0], rh, **tol) and jnp.allclose(c1[0], rc, **tol)

    (lg2, pr2), (h2, c2) = lstm_actor_forward(packed_f32, state, (h0, c0))
    jax.block_until_ready((lg2, pr2, h2, c2))
    rl2, rp2, rh2, rc2 = _reference_rollout(params, state[:, None, :], h0[0], c0[0])
    assert jnp.allclose(lg2, rl2, **tol) and jnp.allclose(pr2, rp2, **tol)
    assert jnp.allclose(h2[0], rh2, **tol) and jnp.allclose(c2[0], rc2, **tol)

    # ---- bf16 weight path (production): T-step rollout in ONE kernel call ----
    packed_bf16 = pack_params(params)                 # default bf16 weights
    qtol = dict(atol=5e-2, rtol=5e-2)                 # bf16 quantization error budget

    (lg3, pr3), (h3, c3) = lstm_actor_rollout(packed_bf16, states, (h0, c0))
    jax.block_until_ready((lg3, pr3, h3, c3))
    rl3, rp3, rh3, rc3 = _reference_rollout(params, states, h0[0], c0[0])
    assert jnp.allclose(lg3, rl3, **qtol) and jnp.allclose(pr3, rp3, **qtol)
    assert jnp.allclose(h3[0], rh3, **qtol) and jnp.allclose(c3[0], rc3, **qtol)

    print("KERNEL_OK")
</pallas_src>

<mosaic_0001>
module attributes {stable_mosaic.version = 11 : i64} {
  func.func @_lstm_actor_rollout_kernel(%arg0: i32, %arg1: memref<1x2x500xf32, #tpu.memory_space<vmem>>, %arg2: memref<2x128xf32, #tpu.memory_space<vmem>>, %arg3: memref<2x128xf32, #tpu.memory_space<vmem>>, %arg4: memref<640x512xf32, #tpu.memory_space<vmem>>, %arg5: memref<1x512xf32, #tpu.memory_space<vmem>>, %arg6: memref<128x128xf32, #tpu.memory_space<vmem>>, %arg7: memref<1x128xf32, #tpu.memory_space<vmem>>, %arg8: memref<2x128xf32, #tpu.memory_space<vmem>>, %arg9: memref<2x128xf32, #tpu.memory_space<vmem>>, %arg10: memref<2x128xf32, #tpu.memory_space<vmem>>, %arg11: memref<2x128xf32, #tpu.memory_space<vmem>>, %arg12: memref<2x640xf32, #tpu.memory_space<vmem>>, %arg13: memref<2x128xf32, #tpu.memory_space<vmem>>, %arg14: memref<2x128xf32, #tpu.memory_space<vmem>>) attributes {dimension_semantics = [#tpu.dimension_semantics<arbitrary>], iteration_bounds = array<i64: 1>, scalar_prefetch = 0 : i64, scratch_operands = 3 : i64, tpu.core_type = #tpu.core_type<tc>, window_params = [{transform_indices = @transform_0, window_bounds = array<i64: 1, 2, 500>}, {pipeline_mode = #tpu.pipeline_mode<synchronous>, transform_indices = @transform_1, window_bounds = array<i64: 2, 128>}, {pipeline_mode = #tpu.pipeline_mode<synchronous>, transform_indices = @transform_2, window_bounds = array<i64: 2, 128>}, {pipeline_mode = #tpu.pipeline_mode<synchronous>, transform_indices = @transform_3, window_bounds = array<i64: 640, 512>}, {pipeline_mode = #tpu.pipeline_mode<synchronous>, transform_indices = @transform_4, window_bounds = array<i64: 1, 512>}, {pipeline_mode = #tpu.pipeline_mode<synchronous>, transform_indices = @transform_5, window_bounds = array<i64: 128, 128>}, {pipeline_mode = #tpu.pipeline_mode<synchronous>, transform_indices = @transform_6, window_bounds = array<i64: 1, 128>}, {pipeline_mode = #tpu.pipeline_mode<synchronous>, transform_indices = @transform_7, window_bounds = array<i64: 2, 128>}, {pipeline_mode = #tpu.pipeline_mode<synchronous>, transform_indices = @transform_8, window_bounds = array<i64: 2, 128>}, {pipeline_mode = #tpu.pipeline_mode<synchronous>, transform_indices = @transform_9, window_bounds = array<i64: 2, 128>}, {pipeline_mode = #tpu.pipeline_mode<synchronous>, transform_indices = @transform_10, window_bounds = array<i64: 2, 128>}]} {
    %c0_i32 = arith.constant 0 : i32
    %0 = arith.cmpi eq, %arg0, %c0_i32 : i32
    %1 = arith.extui %0 : i1 to i32
    %c0_i32_0 = arith.constant 0 : i32
    %2 = arith.cmpi ne, %1, %c0_i32_0 : i32
    scf.if %2 {
      %c0_25 = arith.constant 0 : index
      %c0_26 = arith.constant 0 : index
      %36 = vector.load %arg2[%c0_25, %c0_26] : memref<2x128xf32, #tpu.memory_space<vmem>>, vector<2x128xf32>
      %c0_27 = arith.constant 0 : index
      %c0_28 = arith.constant 0 : index
      %37 = vector.load %arg13[%c0_27, %c0_28] : memref<2x128xf32, #tpu.memory_space<vmem>>, vector<2x128xf32>
      tpu.vector_store %arg13[%c0_27, %c0_28], %36 {strides = array<i32>} : memref<2x128xf32, #tpu.memory_space<vmem>>, vector<2x128xf32>,
      %c0_29 = arith.constant 0 : index
      %c0_30 = arith.constant 0 : index
      %38 = vector.load %arg3[%c0_29, %c0_30] : memref<2x128xf32, #tpu.memory_space<vmem>>, vector<2x128xf32>
      %c0_31 = arith.constant 0 : index
      %c0_32 = arith.constant 0 : index
      %39 = vector.load %arg14[%c0_31, %c0_32] : memref<2x128xf32, #tpu.memory_space<vmem>>, vector<2x128xf32>
      tpu.vector_store %arg14[%c0_31, %c0_32], %38 {strides = array<i32>} : memref<2x128xf32, #tpu.memory_space<vmem>>, vector<2x128xf32>,
      %cst_33 = arith.constant 0.000000e+00 : f32
      %40 = vector.broadcast %cst_33 : f32 to vector<2x12xf32>
      %c0_34 = arith.constant 0 : index
      %c628 = arith.constant 628 : index
      %41 = vector.load %arg12[%c0_34, %c628] : memref<2x640xf32, #tpu.memory_space<vmem>>, vector<2x12xf32>
      tpu.vector_store %arg12[%c0_34, %c628], %40 {strides = array<i32>} : memref<2x640xf32, #tpu.memory_space<vmem>>, vector<2x12xf32>,
    } else {
    }
    %c0 = arith.constant 0 : index
    %c0_1 = arith.constant 0 : index
    %3 = vector.load %arg13[%c0, %c0_1] : memref<2x128xf32, #tpu.memory_space<vmem>>, vector<2x128xf32>
    %c0_2 = arith.constant 0 : index
    %c0_3 = arith.constant 0 : index
    %4 = vector.load %arg12[%c0_2, %c0_3] : memref<2x640xf32, #tpu.memory_space<vmem>>, vector<2x128xf32>
    tpu.vector_store %arg12[%c0_2, %c0_3], %3 {strides = array<i32>} : memref<2x640xf32, #tpu.memory_space<vmem>>, vector<2x128xf32>,
    %c0_4 = arith.constant 0 : index
    %c0_5 = arith.constant 0 : index
    %c0_6 = arith.constant 0 : index
    %5 = vector.load %arg1[%c0_4, %c0_5, %c0_6] : memref<1x2x500xf32, #tpu.memory_space<vmem>>, vector<1x2x500xf32>
    %6 = vector.shape_cast %5 : vector<1x2x500xf32> to vector<2x500xf32>
    %c0_7 = arith.constant 0 : index
    %c128 = arith.constant 128 : index
    %7 = vector.load %arg12[%c0_7, %c128] : memref<2x640xf32, #tpu.memory_space<vmem>>, vector<2x500xf32>
    tpu.vector_store %arg12[%c0_7, %c128], %6 {strides = array<i32>} : memref<2x640xf32, #tpu.memory_space<vmem>>, vector<2x500xf32>,
    %c0_8 = arith.constant 0 : index
    %c0_9 = arith.constant 0 : index
    %8 = vector.load %arg12[%c0_8, %c0_9] : memref<2x640xf32, #tpu.memory_space<vmem>>, vector<2x640xf32>
    %c0_10 = arith.constant 0 : index
    %c0_11 = arith.constant 0 : index
    %9 = vector.load %arg4[%c0_10, %c0_11] : memref<640x512xf32, #tpu.memory_space<vmem>>, vector<640x512xf32>
    %cst = arith.constant dense<0.000000e+00> : vector<2x512xf32>
    %10 = tpu.matmul %8, %9, %cst {dimension_numbers = #tpu.dot_dimension_numbers<[1], [0], [0], [1], [0, 0, 1, 1], [], []>} : vector<2x640xf32>, vector<640x512xf32>, vector<2x512xf32> -> vector<2x512xf32>
    %c0_12 = arith.constant 0 : index
    %c0_13 = arith.constant 0 : index
    %11 = vector.load %arg5[%c0_12, %c0_13] : memref<1x512xf32, #tpu.memory_space<vmem>>, vector<1x512xf32>
    %12 = vector.broadcast %11 : vector<1x512xf32> to vector<2x512xf32>
    %13 = arith.addf %10, %12 : vector<2x512xf32>
    %14 = arith.negf %13 : vector<2x512xf32>
    %15 = math.exp %14 : vector<2x512xf32>
    %cst_14 = arith.constant 1.000000e+00 : f32
    %16 = vector.broadcast %cst_14 : f32 to vector<2x512xf32>
    %17 = arith.addf %16, %15 : vector<2x512xf32>
    %18 = arith.divf %16, %17 : vector<2x512xf32>
    %19 = vector.extract_strided_slice %18 {offsets = [0, 0], sizes = [2, 128], strides = [1, 1]} : vector<2x512xf32> to vector<2x128xf32>
    %20 = vector.extract_strided_slice %18 {offsets = [0, 128], sizes = [2, 128], strides = [1, 1]} : vector<2x512xf32> to vector<2x128xf32>
    %21 = vector.extract_strided_slice %13 {offsets = [0, 256], sizes = [2, 128], strides = [1, 1]} : vector<2x512xf32> to vector<2x128xf32>
    %22 = math.tanh %21 : vector<2x128xf32>
    %23 = vector.extract_strided_slice %18 {offsets = [0, 384], sizes = [2, 128], strides = [1, 1]} : vector<2x512xf32> to vector<2x128xf32>
    %c0_15 = arith.constant 0 : index
    %c0_16 = arith.constant 0 : index
    %24 = vector.load %arg14[%c0_15, %c0_16] : memref<2x128xf32, #tpu.memory_space<vmem>>, vector<2x128xf32>
    %25 = arith.mulf %20, %24 : vector<2x128xf32>
    %26 = arith.mulf %19, %22 : vector<2x128xf32>
    %27 = arith.addf %25, %26 : vector<2x128xf32>
    %28 = math.tanh %27 : vector<2x128xf32>
    %29 = arith.mulf %23, %28 : vector<2x128xf32>
    %c0_17 = arith.constant 0 : index
    %c0_18 = arith.constant 0 : index
    %30 = vector.load %arg13[%c0_17, %c0_18] : memref<2x128xf32, #tpu.memory_space<vmem>>, vector<2x128xf32>
    tpu.vector_store %arg13[%c0_17, %c0_18], %29 {strides = array<i32>} : memref<2x128xf32, #tpu.memory_space<vmem>>, vector<2x128xf32>,
    %c0_19 = arith.constant 0 : index
    %c0_20 = arith.constant 0 : index
    %31 = vector.load %arg13[%c0_19, %c0_20] : memref<2x128xf32, #tpu.memory_space<vmem>>, vector<2x128xf32>
    tpu.vector_store %arg13[%c0_19, %c0_20], %29 {strides = array<i32>} : memref<2x128xf32, #tpu.memory_space<vmem>>, vector<2x128xf32>,
    %c0_21 = arith.constant 0 : index
    %c0_22 = arith.constant 0 : index
    %32 = vector.load %arg14[%c0_21, %c0_22] : memref<2x128xf32, #tpu.memory_space<vmem>>, vector<2x128xf32>
    tpu.vector_store %arg14[%c0_21, %c0_22], %27 {strides = array<i32>} : memref<2x128xf32, #tpu.memory_space<vmem>>, vector<2x128xf32>,
    %c0_i32_23 = arith.constant 0 : i32
    %33 = arith.cmpi eq, %arg0, %c0_i32_23 : i32
    %34 = arith.extui %33 : i1 to i32
    %c0_i32_24 = arith.constant 0 : i32
    %35 = arith.cmpi ne, %34, %c0_i32_24 : i32
    scf.if %35 {
      %c0_25 = arith.constant 0 : index
      %c0_26 = arith.constant 0 : index
      %36 = vector.load %arg6[%c0_25, %c0_26] : memref<128x128xf32, #tpu.memory_space<vmem>>, vector<128x128xf32>
      %cst_27 = arith.constant dense<0.000000e+00> : vector<2x128xf32>
      %37 = tpu.matmul %29, %36, %cst_27 {dimension_numbers = #tpu.dot_dimension_numbers<[1], [0], [0], [1], [0, 0, 1, 1], [], []>} : vector<2x128xf32>, vector<128x128xf32>, vector<2x128xf32> -> vector<2x128xf32>
      %c0_28 = arith.constant 0 : index
      %c0_29 = arith.constant 0 : index
      %38 = vector.load %arg7[%c0_28, %c0_29] : memref<1x128xf32, #tpu.memory_space<vmem>>, vector<1x128xf32>
      %39 = vector.broadcast %38 : vector<1x128xf32> to vector<2x128xf32>
      %40 = arith.addf %37, %39 : vector<2x128xf32>
      %cst_30 = arith.constant dense<0xFF800000> : vector<2xf32>
      %41 = vector.multi_reduction <maximumf>, %40, %cst_30 [1] : vector<2x128xf32> to vector<2xf32>
      %42 = vector.shape_cast %41 : vector<2xf32> to vector<2x1xf32>
      %43 = vector.broadcast %42 : vector<2x1xf32> to vector<2x128xf32>
      %44 = arith.subf %40, %43 : vector<2x128xf32>
      %45 = math.exp %44 : vector<2x128xf32>
      %cst_31 = arith.constant dense<0.000000e+00> : vector<2xf32>
      %46 = vector.multi_reduction <add>, %45, %cst_31 [1] : vector<2x128xf32> to vector<2xf32>
      %47 = vector.shape_cast %46 : vector<2xf32> to vector<2x1xf32>
      %48 = vector.broadcast %47 : vector<2x1xf32> to vector<2x128xf32>
      %49 = arith.divf %45, %48 : vector<2x128xf32>
      %c0_32 = arith.constant 0 : index
      %c0_33 = arith.constant 0 : index
      %50 = vector.load %arg8[%c0_32, %c0_33] : memref<2x128xf32, #tpu.memory_space<vmem>>, vector<2x128xf32>
      tpu.vector_store %arg8[%c0_32, %c0_33], %40 {strides = array<i32>} : memref<2x128xf32, #tpu.memory_space<vmem>>, vector<2x128xf32>,
      %c0_34 = arith.constant 0 : index
      %c0_35 = arith.constant 0 : index
      %51 = vector.load %arg9[%c0_34, %c0_35] : memref<2x128xf32, #tpu.memory_space<vmem>>, vector<2x128xf32>
      tpu.vector_store %arg9[%c0_34, %c0_35], %49 {strides = array<i32>} : memref<2x128xf32, #tpu.memory_space<vmem>>, vector<2x128xf32>,
      %c0_36 = arith.constant 0 : index
      %c0_37 = arith.constant 0 : index
      %52 = vector.load %arg10[%c0_36, %c0_37] : memref<2x128xf32, #tpu.memory_space<vmem>>, vector<2x128xf32>
      tpu.vector_store %arg10[%c0_36, %c0_37], %29 {strides = array<i32>} : memref<2x128xf32, #tpu.memory_space<vmem>>, vector<2x128xf32>,
      %c0_38 = arith.constant 0 : index
      %c0_39 = arith.constant 0 : index
      %53 = vector.load %arg11[%c0_38, %c0_39] : memref<2x128xf32, #tpu.memory_space<vmem>>, vector<2x128xf32>
      tpu.vector_store %arg11[%c0_38, %c0_39], %27 {strides = array<i32>} : memref<2x128xf32, #tpu.memory_space<vmem>>, vector<2x128xf32>,
    } else {
    }
    return
  }
  func.func @transform_0(%arg0: i32) -> (i32, i32, i32) {
    %c0_i32 = arith.constant 0 : i32
    %c0_i32_0 = arith.constant 0 : i32
    %c0_i32_1 = arith.constant 0 : i32
    return %arg0, %c0_i32, %c0_i32_0 : i32, i32, i32
  }
  func.func @transform_1(%arg0: i32) -> (i32, i32) {
    %c0_i32 = arith.constant 0 : i32
    %c0_i32_0 = arith.constant 0 : i32
    %c0_i32_1 = arith.constant 0 : i32
    return %c0_i32, %c0_i32_0 : i32, i32
  }
  func.func @transform_2(%arg0: i32) -> (i32, i32) {
    %c0_i32 = arith.constant 0 : i32
    %c0_i32_0 = arith.constant 0 : i32
    %c0_i32_1 = arith.constant 0 : i32
    return %c0_i32, %c0_i32_0 : i32, i32
  }
  func.func @transform_3(%arg0: i32) -> (i32, i32) {
    %c0_i32 = arith.constant 0 : i32
    %c0_i32_0 = arith.constant 0 : i32
    %c0_i32_1 = arith.constant 0 : i32
    return %c0_i32, %c0_i32_0 : i32, i32
  }
  func.func @transform_4(%arg0: i32) -> (i32, i32) {
    %c0_i32 = arith.constant 0 : i32
    %c0_i32_0 = arith.constant 0 : i32
    %c0_i32_1 = arith.constant 0 : i32
    return %c0_i32, %c0_i32_0 : i32, i32
  }
  func.func @transform_5(%arg0: i32) -> (i32, i32) {
    %c0_i32 = arith.constant 0 : i32
    %c0_i32_0 = arith.constant 0 : i32
    %c0_i32_1 = arith.constant 0 : i32
    return %c0_i32, %c0_i32_0 : i32, i32
  }
  func.func @transform_6(%arg0: i32) -> (i32, i32) {
    %c0_i32 = arith.constant 0 : i32
    %c0_i32_0 = arith.constant 0 : i32
    %c0_i32_1 = arith.constant 0 : i32
    return %c0_i32, %c0_i32_0 : i32, i32
  }
  func.func @transform_7(%arg0: i32) -> (i32, i32) {
    %c0_i32 = arith.constant 0 : i32
    %c0_i32_0 = arith.constant 0 : i32
    %c0_i32_1 = arith.constant 0 : i32
    return %c0_i32, %c0_i32_0 : i32, i32
  }
  func.func @transform_8(%arg0: i32) -> (i32, i32) {
    %c0_i32 = arith.constant 0 : i32
    %c0_i32_0 = arith.constant 0 : i32
    %c0_i32_1 = arith.constant 0 : i32
    return %c0_i32, %c0_i32_0 : i32, i32
  }
  func.func @transform_9(%arg0: i32) -> (i32, i32) {
    %c0_i32 = arith.constant 0 : i32
    %c0_i32_0 = arith.constant 0 : i32
    %c0_i32_1 = arith.constant 0 : i32
    return %c0_i32, %c0_i32_0 : i32, i32
  }
  func.func @transform_10(%arg0: i32) -> (i32, i32) {
    %c0_i32 = arith.constant 0 : i32
    %c0_i32_0 = arith.constant 0 : i32
    %c0_i32_1 = arith.constant 0 : i32
    return %c0_i32, %c0_i32_0 : i32, i32
  }
}

</mosaic_0001>

<llo_original>
// kernel: tpu_custom_call.1
$region0: #{tpu_custom_call.1}
  #allocation0 [shape = 'u32[]', space=smem, size = 0x4, offset = 0x4, fixed_abs, tag = 'smem constant byte address 0x4 - core index']
  #allocation1 [shape = 'u32[144,128]{1,0:T(1,128)}', space=vmem, size = 0x12000, scoped, tag = 'internal scratch']
  #allocation2 [shape = 'f32[2,640]{1,0:T(2,128)}', space=vmem, size = 0x1400, scoped, tag = 'scratch operand']
  #allocation3 [shape = 'f32[2,128]{1,0:T(2,128)}', space=vmem, size = 0x400, scoped, tag = 'scratch operand']
  #allocation4 [shape = 'f32[2,128]{1,0:T(2,128)}', space=vmem, size = 0x400, scoped, tag = 'scratch operand']
  %s0 = inlined_call_operand.hbm [shape: f32[1,2,500], index: 0, kind: input, shape index: {}]
  %s1 = inlined_call_operand.hbm [shape: f32[2,128], index: 1, kind: input, shape index: {}]
  %s2 = inlined_call_operand.hbm [shape: f32[2,128], index: 2, kind: input, shape index: {}]
  %s3 = inlined_call_operand.hbm [shape: f32[640,512], index: 3, kind: input, shape index: {}]
  %s4 = inlined_call_operand.hbm [shape: f32[1,512], index: 4, kind: input, shape index: {}]
  %s5 = inlined_call_operand.hbm [shape: f32[128,128], index: 5, kind: input, shape index: {}]
  %s6 = inlined_call_operand.hbm [shape: f32[1,128], index: 6, kind: input, shape index: {}]
  %s7 = inlined_call_operand.hbm [shape: f32[2,128], index: 7, kind: output, shape index: {0}]
  %s8 = inlined_call_operand.hbm [shape: f32[2,128], index: 8, kind: output, shape index: {1}]
  %s9 = inlined_call_operand.hbm [shape: f32[2,128], index: 9, kind: output, shape index: {2}]
  %s10 = inlined_call_operand.hbm [shape: f32[2,128], index: 10, kind: output, shape index: {3}]
  %11 = xla_tuple %s7, %s8, %s9, %s10
  %s12 = sld [smem:[#allocation0]]
  $region98: #{tpu_custom_call.1} parent=0
    _
  %s14 = ssub.s32 1, %s12
  %s15 = scalar_select 0, %s14, %s12
  $region1: #{tpu_custom_call.1} parent=0
    #allocation5 [shape = 'u8[4096]{0}', space=vmem, size = 0x1000, scoped, tag = 'input window, operand 0, single buffered']
    #allocation6 [shape = 's32[1]{0}', space=sflag, size = 0x4, scoped, tag = 'scoped memory for tpu_custom_call.1']
    #allocation7 [shape = 's32[1]{0}', space=sflag, size = 0x4, scoped, tag = 'scoped memory for tpu_custom_call.1']
    #allocation8 [shape = 'u8[1024]{0}', space=vmem, size = 0x400, scoped, tag = 'input window, operand 1, single buffered']
    #allocation9 [shape = 's32[1]{0}', space=sflag, size = 0x4, scoped, tag = 'scoped memory for tpu_custom_call.1']
    #allocation10 [shape = 'u8[1024]{0}', space=vmem, size = 0x400, scoped, tag = 'input window, operand 2, single buffered']
    #allocation11 [shape = 'u8[1310720]{0}', space=vmem, size = 0x140000, scoped, tag = 'input window, operand 3, single buffered']
    #allocation12 [shape = 's32[1]{0}', space=sflag, size = 0x4, scoped, tag = 'scoped memory for tpu_custom_call.1']
    #allocation13 [shape = 'u8[2048]{0}', space=vmem, size = 0x800, scoped, tag = 'input window, operand 4, single buffered']
    #allocation14 [shape = 'u8[65536]{0}', space=vmem, size = 0x10000, scoped, tag = 'input window, operand 5, single buffered']
    #allocation15 [shape = 's32[1]{0}', space=sflag, size = 0x4, scoped, tag = 'scoped memory for tpu_custom_call.1']
    #allocation16 [shape = 'u8[512]{0}', space=vmem, size = 0x400, scoped, tag = 'input window, operand 6, single buffered']
    #allocation17 [shape = 'u8[1024]{0}', space=vmem, size = 0x400, scoped, tag = 'output window, operand 0, single buffered']
    #allocation18 [shape = 'u8[1024]{0}', space=vmem, size = 0x400, scoped, tag = 'output window, operand 1, single buffered']
    #allocation19 [shape = 's32[1]{0}', space=sflag, size = 0x4, scoped, tag = 'scoped memory for tpu_custom_call.1']
    #allocation20 [shape = 'u8[1024]{0}', space=vmem, size = 0x400, scoped, tag = 'output window, operand 2, single buffered']
    #allocation21 [shape = 'u8[1024]{0}', space=vmem, size = 0x400, scoped, tag = 'output window, operand 3, single buffered']
    #allocation22 [shape = 's32[1]{0}', space=sflag, size = 0x4, scoped, tag = 'scoped memory for tpu_custom_call.1']
    %16 = vsyncpa [#allocation6], 0
    %17 = vsyncpa [#allocation9], 0
    %18 = vsyncpa [#allocation12], 0
    %19 = vsyncpa [#allocation15], 0
    %20 = vsyncpa [#allocation7], 0
    %21 = vsyncpa [#allocation19], 0
    %22 = vsyncpa [#allocation22], 0
    // Predicated region
    $region2: #{tpu_custom_call.1} parent=1 // pred_check
      _
    $region3: #{tpu_custom_call.1} parent=1 // pred_check_branch
      %24 = sbr.rel (0) target = $region5
    $region4: #{tpu_custom_call.1} parent=1 // pred_region
      %s26 = ssub.s32 128, 128
      %27 = vsyncadd [#allocation6], %s26
      %s29 = sshll.u32 [#allocation5], 4
      %s30 = int_to_ptr.vmem [resolvable:$true] %s29
      %32 = dma.hbm_to_vmem [thread:$0]  %s0, 128, %s30, [#allocation6]
    $region5: #{tpu_custom_call.1} parent=1 // pred_fallthru
      _
    // Predicated region
    $region6: #{tpu_custom_call.1} parent=1 // pred_check
      _
    $region7: #{tpu_custom_call.1} parent=1 // pred_check_branch
      %34 = sbr.rel (0) target = $region9
    $region8: #{tpu_custom_call.1} parent=1 // pred_region
      %s36 = ssub.s32 32, 32
      %37 = vsyncadd [#allocation9], %s36
      %s39 = sshll.u32 [#allocation8], 4
      %s40 = int_to_ptr.vmem [resolvable:$true] %s39
      %42 = dma.hbm_to_vmem [thread:$0]  %s1, 32, %s40, [#allocation9]
    $region9: #{tpu_custom_call.1} parent=1 // pred_fallthru
      _
    // Predicated region
    $region10: #{tpu_custom_call.1} parent=1 // pred_check
      _
    $region11: #{tpu_custom_call.1} parent=1 // pred_check_branch
      %44 = sbr.rel (0) target = $region13
    $region12: #{tpu_custom_call.1} parent=1 // pred_region
      %s46 = ssub.s32 32, 32
      %47 = vsyncadd [#allocation9], %s46
      %s49 = sshll.u32 [#allocation10], 4
      %s50 = int_to_ptr.vmem [resolvable:$true] %s49
      %52 = dma.hbm_to_vmem [thread:$0]  %s2, 32, %s50, [#allocation9]
    $region13: #{tpu_custom_call.1} parent=1 // pred_fallthru
      _
    // Predicated region
    $region14: #{tpu_custom_call.1} parent=1 // pred_check
      _
    $region15: #{tpu_custom_call.1} parent=1 // pred_check_branch
      %54 = sbr.rel (0) target = $region17
    $region16: #{tpu_custom_call.1} parent=1 // pred_region
      %s56 = ssub.s32 40960, 40960
      %57 = vsyncadd [#allocation12], %s56
      %s58 = sshll.u32 [#allocation11], 4
      %s59 = int_to_ptr.vmem [resolvable:$true] %s58
      %64 = dma.hbm_to_vmem [thread:$0]  %s3, 40960, %s59, [#allocation12], 512, 512, 32
    $region17: #{tpu_custom_call.1} parent=1 // pred_fallthru
      _
    // Predicated region
    $region18: #{tpu_custom_call.1} parent=1 // pred_check
      _
    $region19: #{tpu_custom_call.1} parent=1 // pred_check_branch
      %66 = sbr.rel (0) target = $region21
    $region20: #{tpu_custom_call.1} parent=1 // pred_region
      %s68 = ssub.s32 64, 64
      %69 = vsyncadd [#allocation12], %s68
      %s71 = sshll.u32 [#allocation13], 4
      %s72 = int_to_ptr.vmem [resolvable:$true] %s71
      %74 = dma.hbm_to_vmem [thread:$0]  %s4, 64, %s72, [#allocation12]
    $region21: #{tpu_custom_call.1} parent=1 // pred_fallthru
      _
    // Predicated region
    $region22: #{tpu_custom_call.1} parent=1 // pred_check
      _
    $region23: #{tpu_custom_call.1} parent=1 // pred_check_branch
      %76 = sbr.rel (0) target = $region25
    $region24: #{tpu_custom_call.1} parent=1 // pred_region
      %s78 = ssub.s32 2048, 2048
      %79 = vsyncadd [#allocation15], %s78
      %s80 = sshll.u32 [#allocation14], 4
      %s81 = int_to_ptr.vmem [resolvable:$true] %s80
      %86 = dma.hbm_to_vmem [thread:$0]  %s5, 2048, %s81, [#allocation15], 128, 128, 8
    $region25: #{tpu_custom_call.1} parent=1 // pred_fallthru
      _
    // Predicated region
    $region26: #{tpu_custom_call.1} parent=1 // pred_check
      _
    $region27: #{tpu_custom_call.1} parent=1 // pred_check_branch
      %88 = sbr.rel (0) target = $region29
    $region28: #{tpu_custom_call.1} parent=1 // pred_region
      %s90 = ssub.s32 16, 16
      %91 = vsyncadd [#allocation15], %s90
      %s93 = sshll.u32 [#allocation16], 4
      %s94 = int_to_ptr.vmem [resolvable:$true] %s93
      %96 = dma.hbm_to_vmem [thread:$0]  %s6, 16, %s94, [#allocation15]
    $region29: #{tpu_custom_call.1} parent=1 // pred_fallthru
      _
    // Predicated region
    $region30: #{tpu_custom_call.1} parent=1 // pred_check
      _
    $region31: #{tpu_custom_call.1} parent=1 // pred_check_branch
      %98 = sbr.rel (0) target = $region33
    $region32: #{tpu_custom_call.1} parent=1 // pred_region
      %99 = dma.done [#allocation6], 128
    $region33: #{tpu_custom_call.1} parent=1 // pred_fallthru
      _
    // Predicated region
    $region34: #{tpu_custom_call.1} parent=1 // pred_check
      _
    $region35: #{tpu_custom_call.1} parent=1 // pred_check_branch
      %101 = sbr.rel (0) target = $region37
    $region36: #{tpu_custom_call.1} parent=1 // pred_region
      %102 = dma.done [#allocation9], 32
    $region37: #{tpu_custom_call.1} parent=1 // pred_fallthru
      _
    // Predicated region
    $region38: #{tpu_custom_call.1} parent=1 // pred_check
      _
    $region39: #{tpu_custom_call.1} parent=1 // pred_check_branch
      %104 = sbr.rel (0) target = $region41
    $region40: #{tpu_custom_call.1} parent=1 // pred_region
      %105 = dma.done [#allocation9], 32
    $region41: #{tpu_custom_call.1} parent=1 // pred_fallthru
      _
    // Predicated region
    $region42: #{tpu_custom_call.1} parent=1 // pred_check
      _
    $region43: #{tpu_custom_call.1} parent=1 // pred_check_branch
      %107 = sbr.rel (0) target = $region45
    $region44: #{tpu_custom_call.1} parent=1 // pred_region
      %108 = dma.done [#allocation12], 40960
    $region45: #{tpu_custom_call.1} parent=1 // pred_fallthru
      _
    // Predicated region
    $region46: #{tpu_custom_call.1} parent=1 // pred_check
      _
    $region47: #{tpu_custom_call.1} parent=1 // pred_check_branch
      %110 = sbr.rel (0) target = $region49
    $region48: #{tpu_custom_call.1} parent=1 // pred_region
      %111 = dma.done [#allocation12], 64
    $region49: #{tpu_custom_call.1} parent=1 // pred_fallthru
      _
    // Predicated region
    $region50: #{tpu_custom_call.1} parent=1 // pred_check
      _
    $region51: #{tpu_custom_call.1} parent=1 // pred_check_branch
      %113 = sbr.rel (0) target = $region53
    $region52: #{tpu_custom_call.1} parent=1 // pred_region
      %114 = dma.done [#allocation15], 2048
    $region53: #{tpu_custom_call.1} parent=1 // pred_fallthru
      _
    // Predicated region
    $region54: #{tpu_custom_call.1} parent=1 // pred_check
      _
    $region55: #{tpu_custom_call.1} parent=1 // pred_check_branch
      %116 = sbr.rel (0) target = $region57
    $region56: #{tpu_custom_call.1} parent=1 // pred_region
      %117 = dma.done [#allocation15], 16
    $region57: #{tpu_custom_call.1} parent=1 // pred_fallthru
      _
    %p118 = scmp.eq.s32.totalorder 0, 0
    // Predicated region
    $region58: #{tpu_custom_call.1} parent=1 // pred_check
      %p119 = pneg %p118
    $region59: #{tpu_custom_call.1} parent=1 // pred_check_branch
      %121 = sbr.rel (%p119) target = $region61
    $region60: #{tpu_custom_call.1} parent=1 // pred_region
      %v122 = vld [vmem:[#allocation8] sm:$0x3]
      %123 = vst [vmem:[#allocation3] sm:$0x3] %v122
      %v124 = vld [vmem:[#allocation10] sm:$0x3]
      %125 = vst [vmem:[#allocation4] sm:$0x3] %v124
      %vm126 = vcmask 1042336
      %127 = vst.msk [vmem:[#allocation2 + $0x8] sm:$0x3] %vm126, 0.0
    $region61: #{tpu_custom_call.1} parent=1 // pred_fallthru
      _
    %v128 = vld [vmem:[#allocation3] sm:$0x3]
    %129 = vst [vmem:[#allocation2] sm:$0x3] %v128
    %v130 = vld [vmem:[#allocation5] sm:$0xff]
    %vm131 = vcmask 1041408
    %vm132 = vcmask 1043458
    %vm133 = vmor %vm132, %vm131
    %vm134 = vcmask 1045508
    %vm135 = vmor %vm134, %vm133
    %vm136 = vcmask 949254
    %vm137 = vmor %vm136, %vm135
    %138 = vst.msk [vmem:[#allocation2 + $0x2] sm:$0xff] %vm137, %v130
    %v139 = vld [vmem:[#allocation2] sm:$0xff]
    %v140 = vld [vmem:[#allocation2 + $0x8] sm:$0x3]
    %v141 = vld [vmem:[#allocation11] sm:$0xff]
    %v142 = vld [vmem:[#allocation11 + $0x8] sm:$0xff]
    %v143 = vld [vmem:[#allocation11 + $0x10] sm:$0xff]
    %v144 = vld [vmem:[#allocation11 + $0x18] sm:$0xff]
    %v145 = vld [vmem:[#allocation11 + $0x20] sm:$0xff]
    %v146 = vld [vmem:[#allocation11 + $0x28] sm:$0xff]
    %v147 = vld [vmem:[#allocation11 + $0x30] sm:$0xff]
    %v148 = vld [vmem:[#allocation11 + $0x38] sm:$0xff]
    %v149 = vld [vmem:[#allocation11 + $0x40] sm:$0xff]
    %v150 = vld [vmem:[#allocation11 + $0x48] sm:$0xff]
    %v151 = vld [vmem:[#allocation11 + $0x50] sm:$0xff]
    %v152 = vld [vmem:[#allocation11 + $0x58] sm:$0xff]
    %v153 = vld [vmem:[#allocation11 + $0x60] sm:$0xff]
    %v154 = vld [vmem:[#allocation11 + $0x68] sm:$0xff]
    %v155 = vld [vmem:[#allocation11 + $0x70] sm:$0xff]
    %v156 = vld [vmem:[#allocation11 + $0x78] sm:$0xff]
    %v157 = vld [vmem:[#allocation11 + $0x80] sm:$0xff]
    %v158 = vld [vmem:[#allocation11 + $0x88] sm:$0xff]
    %v159 = vld [vmem:[#allocation11 + $0x90] sm:$0xff]
    %v160 = vld [vmem:[#allocation11 + $0x98] sm:$0xff]
    %v161 = vld [vmem:[#allocation11 + $0xa0] sm:$0xff]
    %v162 = vld [vmem:[#allocation11 + $0xa8] sm:$0xff]
    %v163 = vld [vmem:[#allocation11 + $0xb0] sm:$0xff]
    %v164 = vld [vmem:[#allocation11 + $0xb8] sm:$0xff]
    %v165 = vld [vmem:[#allocation11 + $0xc0] sm:$0xff]
    %v166 = vld [vmem:[#allocation11 + $0xc8] sm:$0xff]
    %v167 = vld [vmem:[#allocation11 + $0xd0] sm:$0xff]
    %v168 = vld [vmem:[#allocation11 + $0xd8] sm:$0xff]
    %v169 = vld [vmem:[#allocation11 + $0xe0] sm:$0xff]
    %v170 = vld [vmem:[#allocation11 + $0xe8] sm:$0xff]
    %v171 = vld [vmem:[#allocation11 + $0xf0] sm:$0xff]
    %v172 = vld [vmem:[#allocation11 + $0xf8] sm:$0xff]
    %v173 = vld [vmem:[#allocation11 + $0x100] sm:$0xff]
    %v174 = vld [vmem:[#allocation11 + $0x108] sm:$0xff]
    %v175 = vld [vmem:[#allocation11 + $0x110] sm:$0xff]
    %v176 = vld [vmem:[#allocation11 + $0x118] sm:$0xff]
    %v177 = vld [vmem:[#allocation11 + $0x120] sm:$0xff]
    %v178 = vld [vmem:[#allocation11 + $0x128] sm:$0xff]
    %v179 = vld [vmem:[#allocation11 + $0x130] sm:$0xff]
    %v180 = vld [vmem:[#allocation11 + $0x138] sm:$0xff]
    %v181 = vld [vmem:[#allocation11 + $0x140] sm:$0xff]
    %v182 = vld [vmem:[#allocation11 + $0x148] sm:$0xff]
    %v183 = vld [vmem:[#allocation11 + $0x150] sm:$0xff]
    %v184 = vld [vmem:[#allocation11 + $0x158] sm:$0xff]
    %v185 = vld [vmem:[#allocation11 + $0x160] sm:$0xff]
    %v186 = vld [vmem:[#allocation11 + $0x168] sm:$0xff]
    %v187 = vld [vmem:[#allocation11 + $0x170] sm:$0xff]
    %v188 = vld [vmem:[#allocation11 + $0x178] sm:$0xff]
    %v189 = vld [vmem:[#allocation11 + $0x180] sm:$0xff]
    %v190 = vld [vmem:[#allocation11 + $0x188] sm:$0xff]
    %v191 = vld [vmem:[#allocation11 + $0x190] sm:$0xff]
    %v192 = vld [vmem:[#allocation11 + $0x198] sm:$0xff]
    %v193 = vld [vmem:[#allocation11 + $0x1a0] sm:$0xff]
    %v194 = vld [vmem:[#allocation11 + $0x1a8] sm:$0xff]
    %v195 = vld [vmem:[#allocation11 + $0x1b0] sm:$0xff]
    %v196 = vld [vmem:[#allocation11 + $0x1b8] sm:$0xff]
    %v197 = vld [vmem:[#allocation11 + $0x1c0] sm:$0xff]
    %v198 = vld [vmem:[#allocation11 + $0x1c8] sm:$0xff]
    %v199 = vld [vmem:[#allocation11 + $0x1d0] sm:$0xff]
    %v200 = vld [vmem:[#allocation11 + $0x1d8] sm:$0xff]
    %v201 = vld [vmem:[#allocation11 + $0x1e0] sm:$0xff]
    %v202 = vld [vmem:[#allocation11 + $0x1e8] sm:$0xff]
    %v203 = vld [vmem:[#allocation11 + $0x1f0] sm:$0xff]
    %v204 = vld [vmem:[#allocation11 + $0x1f8] sm:$0xff]
    %v205 = vld [vmem:[#allocation11 + $0x200] sm:$0xff]
    %v206 = vld [vmem:[#allocation11 + $0x208] sm:$0xff]
    %v207 = vld [vmem:[#allocation11 + $0x210] sm:$0xff]
    %v208 = vld [vmem:[#allocation11 + $0x218] sm:$0xff]
    %v209 = vld [vmem:[#allocation11 + $0x220] sm:$0xff]
    %v210 = vld [vmem:[#allocation11 + $0x228] sm:$0xff]
    %v211 = vld [vmem:[#allocation11 + $0x230] sm:$0xff]
    %v212 = vld [vmem:[#allocation11 + $0x238] sm:$0xff]
    %v213 = vld [vmem:[#allocation11 + $0x240] sm:$0xff]
    %v214 = vld [vmem:[#allocation11 + $0x248] sm:$0xff]
    %v215 = vld [vmem:[#allocation11 + $0x250] sm:$0xff]
    %v216 = vld [vmem:[#allocation11 + $0x258] sm:$0xff]
    %v217 = vld [vmem:[#allocation11 + $0x260] sm:$0xff]
    %v218 = vld [vmem:[#allocation11 + $0x268] sm:$0xff]
    %v219 = vld [vmem:[#allocation11 + $0x270] sm:$0xff]
    %v220 = vld [vmem:[#allocation11 + $0x278] sm:$0xff]
    %v221 = vld [vmem:[#allocation11 + $0x280] sm:$0xff]
    %v222 = vld [vmem:[#allocation11 + $0x288] sm:$0xff]
    %v223 = vld [vmem:[#allocation11 + $0x290] sm:$0xff]
    %v224 = vld [vmem:[#allocation11 + $0x298] sm:$0xff]
    %v225 = vld [vmem:[#allocation11 + $0x2a0] sm:$0xff]
    %v226 = vld [vmem:[#allocation11 + $0x2a8] sm:$0xff]
    %v227 = vld [vmem:[#allocation11 + $0x2b0] sm:$0xff]
    %v228 = vld [vmem:[#allocation11 + $0x2b8] sm:$0xff]
    %v229 = vld [vmem:[#allocation11 + $0x2c0] sm:$0xff]
    %v230 = vld [vmem:[#allocation11 + $0x2c8] sm:$0xff]
    %v231 = vld [vmem:[#allocation11 + $0x2d0] sm:$0xff]
    %v232 = vld [vmem:[#allocation11 + $0x2d8] sm:$0xff]
    %v233 = vld [vmem:[#allocation11 + $0x2e0] sm:$0xff]
    %v234 = vld [vmem:[#allocation11 + $0x2e8] sm:$0xff]
    %v235 = vld [vmem:[#allocation11 + $0x2f0] sm:$0xff]
    %v236 = vld [vmem:[#allocation11 + $0x2f8] sm:$0xff]
    %v237 = vld [vmem:[#allocation11 + $0x300] sm:$0xff]
    %v238 = vld [vmem:[#allocation11 + $0x308] sm:$0xff]
    %v239 = vld [vmem:[#allocation11 + $0x310] sm:$0xff]
    %v240 = vld [vmem:[#allocation11 + $0x318] sm:$0xff]
    %v241 = vld [vmem:[#allocation11 + $0x320] sm:$0xff]
    %v242 = vld [vmem:[#allocation11 + $0x328] sm:$0xff]
    %v243 = vld [vmem:[#allocation11 + $0x330] sm:$0xff]
    %v244 = vld [vmem:[#allocation11 + $0x338] sm:$0xff]
    %v245 = vld [vmem:[#allocation11 + $0x340] sm:$0xff]
    %v246 = vld [vmem:[#allocation11 + $0x348] sm:$0xff]
    %v247 = vld [vmem:[#allocation11 + $0x350] sm:$0xff]
    %v248 = vld [vmem:[#allocation11 + $0x358] sm:$0xff]
    %v249 = vld [vmem:[#allocation11 + $0x360] sm:$0xff]
    %v250 = vld [vmem:[#allocation11 + $0x368] sm:$0xff]
    %v251 = vld [vmem:[#allocation11 + $0x370] sm:$0xff]
    %v252 = vld [vmem:[#allocation11 + $0x378] sm:$0xff]
    %v253 = vld [vmem:[#allocation11 + $0x380] sm:$0xff]
    %v254 = vld [vmem:[#allocation11 + $0x388] sm:$0xff]
    %v255 = vld [vmem:[#allocation11 + $0x390] sm:$0xff]
    %v256 = vld [vmem:[#allocation11 + $0x398] sm:$0xff]
    %v257 = vld [vmem:[#allocation11 + $0x3a0] sm:$0xff]
    %v258 = vld [vmem:[#allocation11 + $0x3a8] sm:$0xff]
    %v259 = vld [vmem:[#allocation11 + $0x3b0] sm:$0xff]
    %v260 = vld [vmem:[#allocation11 + $0x3b8] sm:$0xff]
    %v261 = vld [vmem:[#allocation11 + $0x3c0] sm:$0xff]
    %v262 = vld [vmem:[#allocation11 + $0x3c8] sm:$0xff]
    %v263 = vld [vmem:[#allocation11 + $0x3d0] sm:$0xff]
    %v264 = vld [vmem:[#allocation11 + $0x3d8] sm:$0xff]
    %v265 = vld [vmem:[#allocation11 + $0x3e0] sm:$0xff]
    %v266 = vld [vmem:[#allocation11 + $0x3e8] sm:$0xff]
    %v267 = vld [vmem:[#allocation11 + $0x3f0] sm:$0xff]
    %v268 = vld [vmem:[#allocation11 + $0x3f8] sm:$0xff]
    %v269 = vld [vmem:[#allocation11 + $0x400] sm:$0xff]
    %v270 = vld [vmem:[#allocation11 + $0x408] sm:$0xff]
    %v271 = vld [vmem:[#allocation11 + $0x410] sm:$0xff]
    %v272 = vld [vmem:[#allocation11 + $0x418] sm:$0xff]
    %v273 = vld [vmem:[#allocation11 + $0x420] sm:$0xff]
    %v274 = vld [vmem:[#allocation11 + $0x428] sm:$0xff]
    %v275 = vld [vmem:[#allocation11 + $0x430] sm:$0xff]
    %v276 = vld [vmem:[#allocation11 + $0x438] sm:$0xff]
    %v277 = vld [vmem:[#allocation11 + $0x440] sm:$0xff]
    %v278 = vld [vmem:[#allocation11 + $0x448] sm:$0xff]
    %v279 = vld [vmem:[#allocation11 + $0x450] sm:$0xff]
    %v280 = vld [vmem:[#allocation11 + $0x458] sm:$0xff]
    %v281 = vld [vmem:[#allocation11 + $0x460] sm:$0xff]
    %v282 = vld [vmem:[#allocation11 + $0x468] sm:$0xff]
    %v283 = vld [vmem:[#allocation11 + $0x470] sm:$0xff]
    %v284 = vld [vmem:[#allocation11 + $0x478] sm:$0xff]
    %v285 = vld [vmem:[#allocation11 + $0x480] sm:$0xff]
    %v286 = vld [vmem:[#allocation11 + $0x488] sm:$0xff]
    %v287 = vld [vmem:[#allocation11 + $0x490] sm:$0xff]
    %v288 = vld [vmem:[#allocation11 + $0x498] sm:$0xff]
    %v289 = vld [vmem:[#allocation11 + $0x4a0] sm:$0xff]
    %v290 = vld [vmem:[#allocation11 + $0x4a8] sm:$0xff]
    %v291 = vld [vmem:[#allocation11 + $0x4b0] sm:$0xff]
    %v292 = vld [vmem:[#allocation11 + $0x4b8] sm:$0xff]
    %v293 = vld [vmem:[#allocation11 + $0x4c0] sm:$0xff]
    %v294 = vld [vmem:[#allocation11 + $0x4c8] sm:$0xff]
    %v295 = vld [vmem:[#allocation11 + $0x4d0] sm:$0xff]
    %v296 = vld [vmem:[#allocation11 + $0x4d8] sm:$0xff]
    %v297 = vld [vmem:[#allocation11 + $0x4e0] sm:$0xff]
    %v298 = vld [vmem:[#allocation11 + $0x4e8] sm:$0xff]
    %v299 = vld [vmem:[#allocation11 + $0x4f0] sm:$0xff]
    %v300 = vld [vmem:[#allocation11 + $0x4f8] sm:$0xff]
    %v301 = vld [vmem:[#allocation11 + $0x500] sm:$0xff]
    %v302 = vld [vmem:[#allocation11 + $0x508] sm:$0xff]
    %v303 = vld [vmem:[#allocation11 + $0x510] sm:$0xff]
    %v304 = vld [vmem:[#allocation11 + $0x518] sm:$0xff]
    %v305 = vld [vmem:[#allocation11 + $0x520] sm:$0xff]
    %v306 = vld [vmem:[#allocation11 + $0x528] sm:$0xff]
    %v307 = vld [vmem:[#allocation11 + $0x530] sm:$0xff]
    %v308 = vld [vmem:[#allocation11 + $0x538] sm:$0xff]
    %v309 = vld [vmem:[#allocation11 + $0x540] sm:$0xff]
    %v310 = vld [vmem:[#allocation11 + $0x548] sm:$0xff]
    %v311 = vld [vmem:[#allocation11 + $0x550] sm:$0xff]
    %v312 = vld [vmem:[#allocation11 + $0x558] sm:$0xff]
    %v313 = vld [vmem:[#allocation11 + $0x560] sm:$0xff]
    %v314 = vld [vmem:[#allocation11 + $0x568] sm:$0xff]
    %v315 = vld [vmem:[#allocation11 + $0x570] sm:$0xff]
    %v316 = vld [vmem:[#allocation11 + $0x578] sm:$0xff]
    %v317 = vld [vmem:[#allocation11 + $0x580] sm:$0xff]
    %v318 = vld [vmem:[#allocation11 + $0x588] sm:$0xff]
    %v319 = vld [vmem:[#allocation11 + $0x590] sm:$0xff]
    %v320 = vld [vmem:[#allocation11 + $0x598] sm:$0xff]
    %v321 = vld [vmem:[#allocation11 + $0x5a0] sm:$0xff]
    %v322 = vld [vmem:[#allocation11 + $0x5a8] sm:$0xff]
    %v323 = vld [vmem:[#allocation11 + $0x5b0] sm:$0xff]
    %v324 = vld [vmem:[#allocation11 + $0x5b8] sm:$0xff]
    %v325 = vld [vmem:[#allocation11 + $0x5c0] sm:$0xff]
    %v326 = vld [vmem:[#allocation11 + $0x5c8] sm:$0xff]
    %v327 = vld [vmem:[#allocation11 + $0x5d0] sm:$0xff]
    %v328 = vld [vmem:[#allocation11 + $0x5d8] sm:$0xff]
    %v329 = vld [vmem:[#allocation11 + $0x5e0] sm:$0xff]
    %v330 = vld [vmem:[#allocation11 + $0x5e8] sm:$0xff]
    %v331 = vld [vmem:[#allocation11 + $0x5f0] sm:$0xff]
    %v332 = vld [vmem:[#allocation11 + $0x5f8] sm:$0xff]
    %v333 = vld [vmem:[#allocation11 + $0x600] sm:$0xff]
    %v334 = vld [vmem:[#allocation11 + $0x608] sm:$0xff]
    %v335 = vld [vmem:[#allocation11 + $0x610] sm:$0xff]
    %v336 = vld [vmem:[#allocation11 + $0x618] sm:$0xff]
    %v337 = vld [vmem:[#allocation11 + $0x620] sm:$0xff]
    %v338 = vld [vmem:[#allocation11 + $0x628] sm:$0xff]
    %v339 = vld [vmem:[#allocation11 + $0x630] sm:$0xff]
    %v340 = vld [vmem:[#allocation11 + $0x638] sm:$0xff]
    %v341 = vld [vmem:[#allocation11 + $0x640] sm:$0xff]
    %v342 = vld [vmem:[#allocation11 + $0x648] sm:$0xff]
    %v343 = vld [vmem:[#allocation11 + $0x650] sm:$0xff]
    %v344 = vld [vmem:[#allocation11 + $0x658] sm:$0xff]
    %v345 = vld [vmem:[#allocation11 + $0x660] sm:$0xff]
    %v346 = vld [vmem:[#allocation11 + $0x668] sm:$0xff]
    %v347 = vld [vmem:[#allocation11 + $0x670] sm:$0xff]
    %v348 = vld [vmem:[#allocation11 + $0x678] sm:$0xff]
    %v349 = vld [vmem:[#allocation11 + $0x680] sm:$0xff]
    %v350 = vld [vmem:[#allocation11 + $0x688] sm:$0xff]
    %v351 = vld [vmem:[#allocation11 + $0x690] sm:$0xff]
    %v352 = vld [vmem:[#allocation11 + $0x698] sm:$0xff]
    %v353 = vld [vmem:[#allocation11 + $0x6a0] sm:$0xff]
    %v354 = vld [vmem:[#allocation11 + $0x6a8] sm:$0xff]
    %v355 = vld [vmem:[#allocation11 + $0x6b0] sm:$0xff]
    %v356 = vld [vmem:[#allocation11 + $0x6b8] sm:$0xff]
    %v357 = vld [vmem:[#allocation11 + $0x6c0] sm:$0xff]
    %v358 = vld [vmem:[#allocation11 + $0x6c8] sm:$0xff]
    %v359 = vld [vmem:[#allocation11 + $0x6d0] sm:$0xff]
    %v360 = vld [vmem:[#allocation11 + $0x6d8] sm:$0xff]
    %v361 = vld [vmem:[#allocation11 + $0x6e0] sm:$0xff]
    %v362 = vld [vmem:[#allocation11 + $0x6e8] sm:$0xff]
    %v363 = vld [vmem:[#allocation11 + $0x6f0] sm:$0xff]
    %v364 = vld [vmem:[#allocation11 + $0x6f8] sm:$0xff]
    %v365 = vld [vmem:[#allocation11 + $0x700] sm:$0xff]
    %v366 = vld [vmem:[#allocation11 + $0x708] sm:$0xff]
    %v367 = vld [vmem:[#allocation11 + $0x710] sm:$0xff]
    %v368 = vld [vmem:[#allocation11 + $0x718] sm:$0xff]
    %v369 = vld [vmem:[#allocation11 + $0x720] sm:$0xff]
    %v370 = vld [vmem:[#allocation11 + $0x728] sm:$0xff]
    %v371 = vld [vmem:[#allocation11 + $0x730] sm:$0xff]
    %v372 = vld [vmem:[#allocation11 + $0x738] sm:$0xff]
    %v373 = vld [vmem:[#allocation11 + $0x740] sm:$0xff]
    %v374 = vld [vmem:[#allocation11 + $0x748] sm:$0xff]
    %v375 = vld [vmem:[#allocation11 + $0x750] sm:$0xff]
    %v376 = vld [vmem:[#allocation11 + $0x758] sm:$0xff]
    %v377 = vld [vmem:[#allocation11 + $0x760] sm:$0xff]
    %v378 = vld [vmem:[#allocation11 + $0x768] sm:$0xff]
    %v379 = vld [vmem:[#allocation11 + $0x770] sm:$0xff]
    %v380 = vld [vmem:[#allocation11 + $0x778] sm:$0xff]
    %v381 = vld [vmem:[#allocation11 + $0x780] sm:$0xff]
    %v382 = vld [vmem:[#allocation11 + $0x788] sm:$0xff]
    %v383 = vld [vmem:[#allocation11 + $0x790] sm:$0xff]
    %v384 = vld [vmem:[#allocation11 + $0x798] sm:$0xff]
    %v385 = vld [vmem:[#allocation11 + $0x7a0] sm:$0xff]
    %v386 = vld [vmem:[#allocation11 + $0x7a8] sm:$0xff]
    %v387 = vld [vmem:[#allocation11 + $0x7b0] sm:$0xff]
    %v388 = vld [vmem:[#allocation11 + $0x7b8] sm:$0xff]
    %v389 = vld [vmem:[#allocation11 + $0x7c0] sm:$0xff]
    %v390 = vld [vmem:[#allocation11 + $0x7c8] sm:$0xff]
    %v391 = vld [vmem:[#allocation11 + $0x7d0] sm:$0xff]
    %v392 = vld [vmem:[#allocation11 + $0x7d8] sm:$0xff]
    %v393 = vld [vmem:[#allocation11 + $0x7e0] sm:$0xff]
    %v394 = vld [vmem:[#allocation11 + $0x7e8] sm:$0xff]
    %v395 = vld [vmem:[#allocation11 + $0x7f0] sm:$0xff]
    %v396 = vld [vmem:[#allocation11 + $0x7f8] sm:$0xff]
    %v397 = vld [vmem:[#allocation11 + $0x800] sm:$0xff]
    %v398 = vld [vmem:[#allocation11 + $0x808] sm:$0xff]
    %v399 = vld [vmem:[#allocation11 + $0x810] sm:$0xff]
    %v400 = vld [vmem:[#allocation11 + $0x818] sm:$0xff]
    %v401 = vld [vmem:[#allocation11 + $0x820] sm:$0xff]
    %v402 = vld [vmem:[#allocation11 + $0x828] sm:$0xff]
    %v403 = vld [vmem:[#allocation11 + $0x830] sm:$0xff]
    %v404 = vld [vmem:[#allocation11 + $0x838] sm:$0xff]
    %v405 = vld [vmem:[#allocation11 + $0x840] sm:$0xff]
    %v406 = vld [vmem:[#allocation11 + $0x848] sm:$0xff]
    %v407 = vld [vmem:[#allocation11 + $0x850] sm:$0xff]
    %v408 = vld [vmem:[#allocation11 + $0x858] sm:$0xff]
    %v409 = vld [vmem:[#allocation11 + $0x860] sm:$0xff]
    %v410 = vld [vmem:[#allocation11 + $0x868] sm:$0xff]
    %v411 = vld [vmem:[#allocation11 + $0x870] sm:$0xff]
    %v412 = vld [vmem:[#allocation11 + $0x878] sm:$0xff]
    %v413 = vld [vmem:[#allocation11 + $0x880] sm:$0xff]
    %v414 = vld [vmem:[#allocation11 + $0x888] sm:$0xff]
    %v415 = vld [vmem:[#allocation11 + $0x890] sm:$0xff]
    %v416 = vld [vmem:[#allocation11 + $0x898] sm:$0xff]
    %v417 = vld [vmem:[#allocation11 + $0x8a0] sm:$0xff]
    %v418 = vld [vmem:[#allocation11 + $0x8a8] sm:$0xff]
    %v419 = vld [vmem:[#allocation11 + $0x8b0] sm:$0xff]
    %v420 = vld [vmem:[#allocation11 + $0x8b8] sm:$0xff]
    %v421 = vld [vmem:[#allocation11 + $0x8c0] sm:$0xff]
    %v422 = vld [vmem:[#allocation11 + $0x8c8] sm:$0xff]
    %v423 = vld [vmem:[#allocation11 + $0x8d0] sm:$0xff]
    %v424 = vld [vmem:[#allocation11 + $0x8d8] sm:$0xff]
    %v425 = vld [vmem:[#allocation11 + $0x8e0] sm:$0xff]
    %v426 = vld [vmem:[#allocation11 + $0x8e8] sm:$0xff]
    %v427 = vld [vmem:[#allocation11 + $0x8f0] sm:$0xff]
    %v428 = vld [vmem:[#allocation11 + $0x8f8] sm:$0xff]
    %v429 = vld [vmem:[#allocation11 + $0x900] sm:$0xff]
    %v430 = vld [vmem:[#allocation11 + $0x908] sm:$0xff]
    %v431 = vld [vmem:[#allocation11 + $0x910] sm:$0xff]
    %v432 = vld [vmem:[#allocation11 + $0x918] sm:$0xff]
    %v433 = vld [vmem:[#allocation11 + $0x920] sm:$0xff]
    %v434 = vld [vmem:[#allocation11 + $0x928] sm:$0xff]
    %v435 = vld [vmem:[#allocation11 + $0x930] sm:$0xff]
    %v436 = vld [vmem:[#allocation11 + $0x938] sm:$0xff]
    %v437 = vld [vmem:[#allocation11 + $0x940] sm:$0xff]
    %v438 = vld [vmem:[#allocation11 + $0x948] sm:$0xff]
    %v439 = vld [vmem:[#allocation11 + $0x950] sm:$0xff]
    %v440 = vld [vmem:[#allocation11 + $0x958] sm:$0xff]
    %v441 = vld [vmem:[#allocation11 + $0x960] sm:$0xff]
    %v442 = vld [vmem:[#allocation11 + $0x968] sm:$0xff]
    %v443 = vld [vmem:[#allocation11 + $0x970] sm:$0xff]
    %v444 = vld [vmem:[#allocation11 + $0x978] sm:$0xff]
    %v445 = vld [vmem:[#allocation11 + $0x980] sm:$0xff]
    %v446 = vld [vmem:[#allocation11 + $0x988] sm:$0xff]
    %v447 = vld [vmem:[#allocation11 + $0x990] sm:$0xff]
    %v448 = vld [vmem:[#allocation11 + $0x998] sm:$0xff]
    %v449 = vld [vmem:[#allocation11 + $0x9a0] sm:$0xff]
    %v450 = vld [vmem:[#allocation11 + $0x9a8] sm:$0xff]
    %v451 = vld [vmem:[#allocation11 + $0x9b0] sm:$0xff]
    %v452 = vld [vmem:[#allocation11 + $0x9b8] sm:$0xff]
    %v453 = vld [vmem:[#allocation11 + $0x9c0] sm:$0xff]
    %v454 = vld [vmem:[#allocation11 + $0x9c8] sm:$0xff]
    %v455 = vld [vmem:[#allocation11 + $0x9d0] sm:$0xff]
    %v456 = vld [vmem:[#allocation11 + $0x9d8] sm:$0xff]
    %v457 = vld [vmem:[#allocation11 + $0x9e0] sm:$0xff]
    %v458 = vld [vmem:[#allocation11 + $0x9e8] sm:$0xff]
    %v459 = vld [vmem:[#allocation11 + $0x9f0] sm:$0xff]
    %v460 = vld [vmem:[#allocation11 + $0x9f8] sm:$0xff]
    %v461 = vld [vmem:[#allocation13] sm:$0xf]
    %v463 = vlaneseq
    %v464 = vshrl.u32 %v463, 7
    %v465 = vsub.s32 0, %v464
    %v466 = vrot.slane %v461, %v465
    %v467 = vlaneseq
    %v468 = vshrl.u32 %v467, 7
    %v469 = vsub.s32 1, %v468
    %v470 = vrot.slane %v461, %v469
    %v471 = vlaneseq
    %v472 = vshrl.u32 %v471, 7
    %v473 = vsub.s32 2, %v472
    %v474 = vrot.slane %v461, %v473
    %v475 = vlaneseq
    %v476 = vshrl.u32 %v475, 7
    %v477 = vsub.s32 3, %v476
    %v478 = vrot.slane %v461, %v477
    %v485 = vcombine.high %v139, %v139
    %v487 = vunpack.c.l.s4 1983009808
    %v488 = vunpack.c.0.s8 %v487
    %v489 = vlaneseq
    %v490 = vshrl.u32 %v489, 7
    %v491 = vsub.s32 %v488, %v490
    %v492 = vrot.slane %v139, %v491
    %v494 = vunpack.c.l.s4 1983009808
    %v495 = vunpack.c.0.s8 %v494
    %v496 = vlaneseq
    %v497 = vshrl.u32 %v496, 7
    %v498 = vsub.s32 %v495, %v497
    %v499 = vrot.slane %v485, %v498
    %v500 = vcombine.high %v492, %v492
    %v501 = vcombine.high %v499, %v499
    %v503 = vunpack.c.l.s4 1983009808
    %v504 = vunpack.c.0.s8 %v503
    %v505 = vlaneseq
    %v506 = vshrl.u32 %v505, 7
    %v507 = vsub.s32 %v504, %v506
    %v508 = vrot.slane %v140, %v507
    %514 = vmatprep.subr.mxu0 %v142
    %515 = vmatpush1.msra.mxu0 %v141
    %516 = vmatprep.subr.mxu0 %v146
    %517 = vmatpush1.msra.mxu0 %v145
    %518 = vmatprep.subr.mxu0 %v150
    %519 = vmatpush1.msra.mxu0 %v149
    %520 = vmatprep.subr.mxu0 %v154
    %521 = vmatpush1.msra.mxu0 %v153
    %522 = vmatprep.subr.mxu0 %v158
    %523 = vmatpush1.msra.mxu0 %v157
    %524 = vmatprep.subr.mxu0 %v162
    %525 = vmatpush1.msra.mxu0 %v161
    %526 = vmatprep.subr.mxu0 %v166
    %527 = vmatpush1.msra.mxu0 %v165
    %528 = vmatprep.subr.mxu0 %v170
    %529 = vmatpush1.msra.mxu0 %v169
    %530 = vmatprep.subr.mxu0 %v174
    %531 = vmatpush1.msra.mxu0 %v173
    %532 = vmatprep.subr.mxu0 %v178
    %533 = vmatpush1.msra.mxu0 %v177
    %534 = vmatprep.subr.mxu0 %v182
    %535 = vmatpush1.msra.mxu0 %v181
    %536 = vmatprep.subr.mxu0 %v186
    %537 = vmatpush1.msra.mxu0 %v185
    %538 = vmatprep.subr.mxu0 %v190
    %539 = vmatpush1.msra.mxu0 %v189
    %540 = vmatprep.subr.mxu0 %v194
    %541 = vmatpush1.msra.mxu0 %v193
    %542 = vmatprep.subr.mxu0 %v198
    %543 = vmatpush1.msra.mxu0 %v197
    %544 = vmatprep.subr.mxu0 %v202
    %545 = vmatpush1.msra.mxu0 %v201
    %546 = vmatprep.subr.mxu0 %v206
    %547 = vmatpush1.msra.mxu0 %v205
    %548 = vmatprep.subr.mxu0 %v210
    %549 = vmatpush1.msra.mxu0 %v209
    %550 = vmatprep.subr.mxu0 %v214
    %551 = vmatpush1.msra.mxu0 %v213
    %552 = vmatprep.subr.mxu0 %v218
    %553 = vmatpush1.msra.mxu0 %v217
    %554 = vmatprep.subr.mxu0 %v222
    %555 = vmatpush1.msra.mxu0 %v221
    %556 = vmatprep.subr.mxu0 %v226
    %557 = vmatpush1.msra.mxu0 %v225
    %558 = vmatprep.subr.mxu0 %v230
    %559 = vmatpush1.msra.mxu0 %v229
    %560 = vmatprep.subr.mxu0 %v234
    %561 = vmatpush1.msra.mxu0 %v233
    %562 = vmatprep.subr.mxu0 %v238
    %563 = vmatpush1.msra.mxu0 %v237
    %564 = vmatprep.subr.mxu0 %v242
    %565 = vmatpush1.msra.mxu0 %v241
    %566 = vmatprep.subr.mxu0 %v246
    %567 = vmatpush1.msra.mxu0 %v245
    %568 = vmatprep.subr.mxu0 %v250
    %569 = vmatpush1.msra.mxu0 %v249
    %570 = vmatprep.subr.mxu0 %v254
    %571 = vmatpush1.msra.mxu0 %v253
    %572 = vmatprep.subr.mxu0 %v258
    %573 = vmatpush1.msra.mxu0 %v257
    %574 = vmatprep.subr.mxu0 %v262
    %575 = vmatpush1.msra.mxu0 %v261
    %576 = vmatprep.subr.mxu0 %v266
    %577 = vmatpush1.msra.mxu0 %v265
    %578 = vmatprep.mubr.f32.mxu0 %v500
    %579 = vmatmul.mubr.f32.gmra.mrb[0].mxu0 %v492
    %v580 = vpop.f32.mrb[0].mxu0
    %v581 = vadd.f32 %v466, %v580
    %v582 = vpop.f32.mrb[0].mxu0
    %v583 = vadd.f32 %v470, %v582
    %584 = vdwg.mxu0
    %585 = vmatprep.subr.mxu0 %v270
    %586 = vmatpush1.msra.mxu0 %v269
    %587 = vmatprep.subr.mxu0 %v274
    %588 = vmatpush1.msra.mxu0 %v273
    %589 = vmatprep.subr.mxu0 %v278
    %590 = vmatpush1.msra.mxu0 %v277
    %591 = vmatprep.subr.mxu0 %v282
    %592 = vmatpush1.msra.mxu0 %v281
    %593 = vmatprep.subr.mxu0 %v286
    %594 = vmatpush1.msra.mxu0 %v285
    %595 = vmatprep.subr.mxu0 %v290
    %596 = vmatpush1.msra.mxu0 %v289
    %597 = vmatprep.subr.mxu0 %v294
    %598 = vmatpush1.msra.mxu0 %v293
    %599 = vmatprep.subr.mxu0 %v298
    %600 = vmatpush1.msra.mxu0 %v297
    %601 = vmatprep.subr.mxu0 %v302
    %602 = vmatpush1.msra.mxu0 %v301
    %603 = vmatprep.subr.mxu0 %v306
    %604 = vmatpush1.msra.mxu0 %v305
    %605 = vmatprep.subr.mxu0 %v310
    %606 = vmatpush1.msra.mxu0 %v309
    %607 = vmatprep.subr.mxu0 %v314
    %608 = vmatpush1.msra.mxu0 %v313
    %609 = vmatprep.subr.mxu0 %v318
    %610 = vmatpush1.msra.mxu0 %v317
    %611 = vmatprep.subr.mxu0 %v322
    %612 = vmatpush1.msra.mxu0 %v321
    %613 = vmatprep.subr.mxu0 %v326
    %614 = vmatpush1.msra.mxu0 %v325
    %615 = vmatprep.subr.mxu0 %v330
    %616 = vmatpush1.msra.mxu0 %v329
    %617 = vmatprep.subr.mxu0 %v334
    %618 = vmatpush1.msra.mxu0 %v333
    %619 = vmatprep.subr.mxu0 %v338
    %620 = vmatpush1.msra.mxu0 %v337
    %621 = vmatprep.subr.mxu0 %v342
    %622 = vmatpush1.msra.mxu0 %v341
    %623 = vmatprep.subr.mxu0 %v346
    %624 = vmatpush1.msra.mxu0 %v345
    %625 = vmatprep.subr.mxu0 %v350
    %626 = vmatpush1.msra.mxu0 %v349
    %627 = vmatprep.subr.mxu0 %v354
    %628 = vmatpush1.msra.mxu0 %v353
    %629 = vmatprep.subr.mxu0 %v358
    %630 = vmatpush1.msra.mxu0 %v357
    %631 = vmatprep.subr.mxu0 %v362
    %632 = vmatpush1.msra.mxu0 %v361
    %633 = vmatprep.subr.mxu0 %v366
    %634 = vmatpush1.msra.mxu0 %v365
    %635 = vmatprep.subr.mxu0 %v370
    %636 = vmatpush1.msra.mxu0 %v369
    %637 = vmatprep.subr.mxu0 %v374
    %638 = vmatpush1.msra.mxu0 %v373
    %639 = vmatprep.subr.mxu0 %v378
    %640 = vmatpush1.msra.mxu0 %v377
    %641 = vmatprep.subr.mxu0 %v382
    %642 = vmatpush1.msra.mxu0 %v381
    %643 = vmatprep.subr.mxu0 %v386
    %644 = vmatpush1.msra.mxu0 %v385
    %645 = vmatprep.subr.mxu0 %v390
    %646 = vmatpush1.msra.mxu0 %v389
    %647 = vmatprep.subr.mxu0 %v394
    %648 = vmatpush1.msra.mxu0 %v393
    %649 = vmatprep.mubr.f32.mxu0 %v501
    %650 = vmatmul.mubr.f32.gmra.mrb[0].mxu0 %v499
    %v651 = vpop.f32.mrb[0].mxu0
    %v652 = vadd.f32 %v581, %v651
    %v653 = vpop.f32.mrb[0].mxu0
    %v654 = vadd.f32 %v583, %v653
    %655 = vdwg.mxu0
    %656 = vmatprep.subr.mxu0 %v398
    %657 = vmatpush1.msra.mxu0 %v397
    %658 = vmatprep.subr.mxu0 %v402
    %659 = vmatpush1.msra.mxu0 %v401
    %660 = vmatprep.subr.mxu0 %v406
    %661 = vmatpush1.msra.mxu0 %v405
    %662 = vmatprep.subr.mxu0 %v410
    %663 = vmatpush1.msra.mxu0 %v409
    %664 = vmatprep.subr.mxu0 %v414
    %665 = vmatpush1.msra.mxu0 %v413
    %666 = vmatprep.subr.mxu0 %v418
    %667 = vmatpush1.msra.mxu0 %v417
    %668 = vmatprep.subr.mxu0 %v422
    %669 = vmatpush1.msra.mxu0 %v421
    %670 = vmatprep.subr.mxu0 %v426
    %671 = vmatpush1.msra.mxu0 %v425
    %672 = vmatprep.subr.mxu0 %v430
    %673 = vmatpush1.msra.mxu0 %v429
    %674 = vmatprep.subr.mxu0 %v434
    %675 = vmatpush1.msra.mxu0 %v433
    %676 = vmatprep.subr.mxu0 %v438
    %677 = vmatpush1.msra.mxu0 %v437
    %678 = vmatprep.subr.mxu0 %v442
    %679 = vmatpush1.msra.mxu0 %v441
    %680 = vmatprep.subr.mxu0 %v446
    %681 = vmatpush1.msra.mxu0 %v445
    %682 = vmatprep.subr.mxu0 %v450
    %683 = vmatpush1.msra.mxu0 %v449
    %684 = vmatprep.subr.mxu0 %v454
    %685 = vmatpush1.msra.mxu0 %v453
    %686 = vmatprep.subr.mxu0 %v458
    %687 = vmatpush1.msra.mxu0 %v457
    %688 = vmatprep.subr.mxu0 0.0
    %689 = vmatpush1.msra.mxu0 0.0
    %690 = vmatprep.subr.mxu0 0.0
    %691 = vmatpush1.msra.mxu0 0.0
    %692 = vmatprep.subr.mxu0 0.0
    %693 = vmatpush1.msra.mxu0 0.0
    %694 = vmatprep.subr.mxu0 0.0
    %695 = vmatpush1.msra.mxu0 0.0
    %696 = vmatprep.subr.mxu0 0.0
    %697 = vmatpush1.msra.mxu0 0.0
    %698 = vmatprep.subr.mxu0 0.0
    %699 = vmatpush1.msra.mxu0 0.0
    %700 = vmatprep.subr.mxu0 0.0
    %701 = vmatpush1.msra.mxu0 0.0
    %702 = vmatprep.subr.mxu0 0.0
    %703 = vmatpush1.msra.mxu0 0.0
    %704 = vmatprep.subr.mxu0 0.0
    %705 = vmatpush1.msra.mxu0 0.0
    %706 = vmatprep.subr.mxu0 0.0
    %707 = vmatpush1.msra.mxu0 0.0
    %708 = vmatprep.subr.mxu0 0.0
    %709 = vmatpush1.msra.mxu0 0.0
    %710 = vmatprep.subr.mxu0 0.0
    %711 = vmatpush1.msra.mxu0 0.0
    %712 = vmatprep.subr.mxu0 0.0
    %713 = vmatpush1.msra.mxu0 0.0
    %714 = vmatprep.subr.mxu0 0.0
    %715 = vmatpush1.msra.mxu0 0.0
    %716 = vmatprep.subr.mxu0 0.0
    %717 = vmatpush1.msra.mxu0 0.0
    %718 = vmatprep.subr.mxu0 0.0
    %719 = vmatpush1.msra.mxu0 0.0
    %720 = vmatprep.mubr.f32.mxu0 0.0
    %721 = vmatmul.mubr.f32.gmra.mrb[0].mxu0 %v508
    %v722 = vpop.f32.mrb[0].mxu0
    %v723 = vadd.f32 %v652, %v722
    %v724 = vpop.f32.mrb[0].mxu0
    %v725 = vadd.f32 %v654, %v724
    %726 = vdwg.mxu0
    %727 = vmatprep.subr.mxu0 %v144
    %728 = vmatpush1.msra.mxu0 %v143
    %729 = vmatprep.subr.mxu0 %v148
    %730 = vmatpush1.msra.mxu0 %v147
    %731 = vmatprep.subr.mxu0 %v152
    %732 = vmatpush1.msra.mxu0 %v151
    %733 = vmatprep.subr.mxu0 %v156
    %734 = vmatpush1.msra.mxu0 %v155
    %735 = vmatprep.subr.mxu0 %v160
    %736 = vmatpush1.msra.mxu0 %v159
    %737 = vmatprep.subr.mxu0 %v164
    %738 = vmatpush1.msra.mxu0 %v163
    %739 = vmatprep.subr.mxu0 %v168
    %740 = vmatpush1.msra.mxu0 %v167
    %741 = vmatprep.subr.mxu0 %v172
    %742 = vmatpush1.msra.mxu0 %v171
    %743 = vmatprep.subr.mxu0 %v176
    %744 = vmatpush1.msra.mxu0 %v175
    %745 = vmatprep.subr.mxu0 %v180
    %746 = vmatpush1.msra.mxu0 %v179
    %747 = vmatprep.subr.mxu0 %v184
    %748 = vmatpush1.msra.mxu0 %v183
    %749 = vmatprep.subr.mxu0 %v188
    %750 = vmatpush1.msra.mxu0 %v187
    %751 = vmatprep.subr.mxu0 %v192
    %752 = vmatpush1.msra.mxu0 %v191
    %753 = vmatprep.subr.mxu0 %v196
    %754 = vmatpush1.msra.mxu0 %v195
    %755 = vmatprep.subr.mxu0 %v200
    %756 = vmatpush1.msra.mxu0 %v199
    %757 = vmatprep.subr.mxu0 %v204
    %758 = vmatpush1.msra.mxu0 %v203
    %759 = vmatprep.subr.mxu0 %v208
    %760 = vmatpush1.msra.mxu0 %v207
    %761 = vmatprep.subr.mxu0 %v212
    %762 = vmatpush1.msra.mxu0 %v211
    %763 = vmatprep.subr.mxu0 %v216
    %764 = vmatpush1.msra.mxu0 %v215
    %765 = vmatprep.subr.mxu0 %v220
    %766 = vmatpush1.msra.mxu0 %v219
    %767 = vmatprep.subr.mxu0 %v224
    %768 = vmatpush1.msra.mxu0 %v223
    %769 = vmatprep.subr.mxu0 %v228
    %770 = vmatpush1.msra.mxu0 %v227
    %771 = vmatprep.subr.mxu0 %v232
    %772 = vmatpush1.msra.mxu0 %v231
    %773 = vmatprep.subr.mxu0 %v236
    %774 = vmatpush1.msra.mxu0 %v235
    %775 = vmatprep.subr.mxu0 %v240
    %776 = vmatpush1.msra.mxu0 %v239
    %777 = vmatprep.subr.mxu0 %v244
    %778 = vmatpush1.msra.mxu0 %v243
    %779 = vmatprep.subr.mxu0 %v248
    %780 = vmatpush1.msra.mxu0 %v247
    %781 = vmatprep.subr.mxu0 %v252
    %782 = vmatpush1.msra.mxu0 %v251
    %783 = vmatprep.subr.mxu0 %v256
    %784 = vmatpush1.msra.mxu0 %v255
    %785 = vmatprep.subr.mxu0 %v260
    %786 = vmatpush1.msra.mxu0 %v259
    %787 = vmatprep.subr.mxu0 %v264
    %788 = vmatpush1.msra.mxu0 %v263
    %789 = vmatprep.subr.mxu0 %v268
    %790 = vmatpush1.msra.mxu0 %v267
    %791 = vmatprep.mubr.f32.mxu0 %v500
    %792 = vmatmul.mubr.f32.gmra.mrb[0].mxu0 %v492
    %v793 = vpop.f32.mrb[0].mxu0
    %v794 = vadd.f32 %v474, %v793
    %v795 = vpop.f32.mrb[0].mxu0
    %v796 = vadd.f32 %v478, %v795
    %797 = vdwg.mxu0
    %798 = vmatprep.subr.mxu0 %v272
    %799 = vmatpush1.msra.mxu0 %v271
    %800 = vmatprep.subr.mxu0 %v276
    %801 = vmatpush1.msra.mxu0 %v275
    %802 = vmatprep.subr.mxu0 %v280
    %803 = vmatpush1.msra.mxu0 %v279
    %804 = vmatprep.subr.mxu0 %v284
    %805 = vmatpush1.msra.mxu0 %v283
    %806 = vmatprep.subr.mxu0 %v288
    %807 = vmatpush1.msra.mxu0 %v287
    %808 = vmatprep.subr.mxu0 %v292
    %809 = vmatpush1.msra.mxu0 %v291
    %810 = vmatprep.subr.mxu0 %v296
    %811 = vmatpush1.msra.mxu0 %v295
    %812 = vmatprep.subr.mxu0 %v300
    %813 = vmatpush1.msra.mxu0 %v299
    %814 = vmatprep.subr.mxu0 %v304
    %815 = vmatpush1.msra.mxu0 %v303
    %816 = vmatprep.subr.mxu0 %v308
    %817 = vmatpush1.msra.mxu0 %v307
    %818 = vmatprep.subr.mxu0 %v312
    %819 = vmatpush1.msra.mxu0 %v311
    %820 = vmatprep.subr.mxu0 %v316
    %821 = vmatpush1.msra.mxu0 %v315
    %822 = vmatprep.subr.mxu0 %v320
    %823 = vmatpush1.msra.mxu0 %v319
    %824 = vmatprep.subr.mxu0 %v324
    %825 = vmatpush1.msra.mxu0 %v323
    %826 = vmatprep.subr.mxu0 %v328
    %827 = vmatpush1.msra.mxu0 %v327
    %828 = vmatprep.subr.mxu0 %v332
    %829 = vmatpush1.msra.mxu0 %v331
    %830 = vmatprep.subr.mxu0 %v336
    %831 = vmatpush1.msra.mxu0 %v335
    %832 = vmatprep.subr.mxu0 %v340
    %833 = vmatpush1.msra.mxu0 %v339
    %834 = vmatprep.subr.mxu0 %v344
    %835 = vmatpush1.msra.mxu0 %v343
    %836 = vmatprep.subr.mxu0 %v348
    %837 = vmatpush1.msra.mxu0 %v347
    %838 = vmatprep.subr.mxu0 %v352
    %839 = vmatpush1.msra.mxu0 %v351
    %840 = vmatprep.subr.mxu0 %v356
    %841 = vmatpush1.msra.mxu0 %v355
    %842 = vmatprep.subr.mxu0 %v360
    %843 = vmatpush1.msra.mxu0 %v359
    %844 = vmatprep.subr.mxu0 %v364
    %845 = vmatpush1.msra.mxu0 %v363
    %846 = vmatprep.subr.mxu0 %v368
    %847 = vmatpush1.msra.mxu0 %v367
    %848 = vmatprep.subr.mxu0 %v372
    %849 = vmatpush1.msra.mxu0 %v371
    %850 = vmatprep.subr.mxu0 %v376
    %851 = vmatpush1.msra.mxu0 %v375
    %852 = vmatprep.subr.mxu0 %v380
    %853 = vmatpush1.msra.mxu0 %v379
    %854 = vmatprep.subr.mxu0 %v384
    %855 = vmatpush1.msra.mxu0 %v383
    %856 = vmatprep.subr.mxu0 %v388
    %857 = vmatpush1.msra.mxu0 %v387
    %858 = vmatprep.subr.mxu0 %v392
    %859 = vmatpush1.msra.mxu0 %v391
    %860 = vmatprep.subr.mxu0 %v396
    %861 = vmatpush1.msra.mxu0 %v395
    %862 = vmatprep.mubr.f32.mxu0 %v501
    %863 = vmatmul.mubr.f32.gmra.mrb[0].mxu0 %v499
    %v864 = vpop.f32.mrb[0].mxu0
    %v865 = vadd.f32 %v794, %v864
    %v866 = vpop.f32.mrb[0].mxu0
    %v867 = vadd.f32 %v796, %v866
    %868 = vdwg.mxu0
    %869 = vmatprep.subr.mxu0 %v400
    %870 = vmatpush1.msra.mxu0 %v399
    %871 = vmatprep.subr.mxu0 %v404
    %872 = vmatpush1.msra.mxu0 %v403
    %873 = vmatprep.subr.mxu0 %v408
    %874 = vmatpush1.msra.mxu0 %v407
    %875 = vmatprep.subr.mxu0 %v412
    %876 = vmatpush1.msra.mxu0 %v411
    %877 = vmatprep.subr.mxu0 %v416
    %878 = vmatpush1.msra.mxu0 %v415
    %879 = vmatprep.subr.mxu0 %v420
    %880 = vmatpush1.msra.mxu0 %v419
    %881 = vmatprep.subr.mxu0 %v424
    %882 = vmatpush1.msra.mxu0 %v423
    %883 = vmatprep.subr.mxu0 %v428
    %884 = vmatpush1.msra.mxu0 %v427
    %885 = vmatprep.subr.mxu0 %v432
    %886 = vmatpush1.msra.mxu0 %v431
    %887 = vmatprep.subr.mxu0 %v436
    %888 = vmatpush1.msra.mxu0 %v435
    %889 = vmatprep.subr.mxu0 %v440
    %890 = vmatpush1.msra.mxu0 %v439
    %891 = vmatprep.subr.mxu0 %v444
    %892 = vmatpush1.msra.mxu0 %v443
    %893 = vmatprep.subr.mxu0 %v448
    %894 = vmatpush1.msra.mxu0 %v447
    %895 = vmatprep.subr.mxu0 %v452
    %896 = vmatpush1.msra.mxu0 %v451
    %897 = vmatprep.subr.mxu0 %v456
    %898 = vmatpush1.msra.mxu0 %v455
    %899 = vmatprep.subr.mxu0 %v460
    %900 = vmatpush1.msra.mxu0 %v459
    %901 = vmatprep.subr.mxu0 0.0
    %902 = vmatpush1.msra.mxu0 0.0
    %903 = vmatprep.subr.mxu0 0.0
    %904 = vmatpush1.msra.mxu0 0.0
    %905 = vmatprep.subr.mxu0 0.0
    %906 = vmatpush1.msra.mxu0 0.0
    %907 = vmatprep.subr.mxu0 0.0
    %908 = vmatpush1.msra.mxu0 0.0
    %909 = vmatprep.subr.mxu0 0.0
    %910 = vmatpush1.msra.mxu0 0.0
    %911 = vmatprep.subr.mxu0 0.0
    %912 = vmatpush1.msra.mxu0 0.0
    %913 = vmatprep.subr.mxu0 0.0
    %914 = vmatpush1.msra.mxu0 0.0
    %915 = vmatprep.subr.mxu0 0.0
    %916 = vmatpush1.msra.mxu0 0.0
    %917 = vmatprep.subr.mxu0 0.0
    %918 = vmatpush1.msra.mxu0 0.0
    %919 = vmatprep.subr.mxu0 0.0
    %920 = vmatpush1.msra.mxu0 0.0
    %921 = vmatprep.subr.mxu0 0.0
    %922 = vmatpush1.msra.mxu0 0.0
    %923 = vmatprep.subr.mxu0 0.0
    %924 = vmatpush1.msra.mxu0 0.0
    %925 = vmatprep.subr.mxu0 0.0
    %926 = vmatpush1.msra.mxu0 0.0
    %927 = vmatprep.subr.mxu0 0.0
    %928 = vmatpush1.msra.mxu0 0.0
    %929 = vmatprep.subr.mxu0 0.0
    %930 = vmatpush1.msra.mxu0 0.0
    %931 = vmatprep.subr.mxu0 0.0
    %932 = vmatpush1.msra.mxu0 0.0
    %933 = vmatprep.mubr.f32.mxu0 0.0
    %934 = vmatmul.mubr.f32.gmra.mrb[0].mxu0 %v508
    %v935 = vpop.f32.mrb[0].mxu0
    %v936 = vadd.f32 %v865, %v935
    %v937 = vpop.f32.mrb[0].mxu0
    %v938 = vadd.f32 %v867, %v937
    %939 = vdwg.mxu0
    %v940 = vxor.u32 %v723, 2147483648
    %v941 = vxor.u32 %v725, 2147483648
    %v942 = vxor.u32 %v938, 2147483648
    %v943 = vmul.f32 %v940, 1.442695
    %v944 = vpow.pop %v943
    %v945 = vmul.f32 %v941, 1.442695
    %v946 = vpow.pop %v945
    %v947 = vmul.f32 %v942, 1.442695
    %v948 = vpow.pop %v947
    %v949 = vadd.f32 %v944, 1.0
    %v950 = vadd.f32 %v946, 1.0
    %v951 = vadd.f32 %v948, 1.0
    %v952 = vrcp.pop %v949
    %v953 = vmul.f32 1.0, %v952
    %v954 = vrcp.pop %v950
    %v955 = vmul.f32 1.0, %v954
    %v956 = vrcp.pop %v951
    %v957 = vmul.f32 1.0, %v956
    %v958 = vtanh.pop %v936
    %v959 = vld [vmem:[#allocation4] sm:$0x3]
    %v960 = vmul.f32 %v955, %v959
    %v961 = vmul.f32 %v953, %v958
    %v962 = vadd.f32 %v960, %v961
    %v963 = vtanh.pop %v962
    %v964 = vmul.f32 %v957, %v963
    %965 = vst [vmem:[#allocation3] sm:$0x3] %v964
    %966 = vst [vmem:[#allocation3] sm:$0x3] %v964
    %967 = vst [vmem:[#allocation4] sm:$0x3] %v962
    // Predicated region
    $region62: #{tpu_custom_call.1} parent=1 // pred_check
      %p968 = pneg %p118
    $region63: #{tpu_custom_call.1} parent=1 // pred_check_branch
      %970 = sbr.rel (%p968) target = $region65
    $region64: #{tpu_custom_call.1} parent=1 // pred_region
      %v971 = vld [vmem:[#allocation14] sm:$0xff]
      %v972 = vld [vmem:[#allocation14 + $0x8] sm:$0xff]
      %v973 = vld [vmem:[#allocation14 + $0x10] sm:$0xff]
      %v974 = vld [vmem:[#allocation14 + $0x18] sm:$0xff]
      %v975 = vld [vmem:[#allocation14 + $0x20] sm:$0xff]
      %v976 = vld [vmem:[#allocation14 + $0x28] sm:$0xff]
      %v977 = vld [vmem:[#allocation14 + $0x30] sm:$0xff]
      %v978 = vld [vmem:[#allocation14 + $0x38] sm:$0xff]
      %v979 = vld [vmem:[#allocation14 + $0x40] sm:$0xff]
      %v980 = vld [vmem:[#allocation14 + $0x48] sm:$0xff]
      %v981 = vld [vmem:[#allocation14 + $0x50] sm:$0xff]
      %v982 = vld [vmem:[#allocation14 + $0x58] sm:$0xff]
      %v983 = vld [vmem:[#allocation14 + $0x60] sm:$0xff]
      %v984 = vld [vmem:[#allocation14 + $0x68] sm:$0xff]
      %v985 = vld [vmem:[#allocation14 + $0x70] sm:$0xff]
      %v986 = vld [vmem:[#allocation14 + $0x78] sm:$0xff]
      %v987 = vld [vmem:[#allocation16] sm:$0x1]
      %v989 = vlaneseq
      %v990 = vshrl.u32 %v989, 7
      %v991 = vsub.s32 0, %v990
      %v992 = vrot.slane %v987, %v991
      %994 = vmatprep.subr.mxu0 0.0
      %995 = vmatpush1.msra.mxu0 %v971
      %996 = vmatprep.subr.mxu0 0.0
      %997 = vmatpush1.msra.mxu0 %v972
      %998 = vmatprep.subr.mxu0 0.0
      %999 = vmatpush1.msra.mxu0 %v973
      %1000 = vmatprep.subr.mxu0 0.0
      %1001 = vmatpush1.msra.mxu0 %v974
      %1002 = vmatprep.subr.mxu0 0.0
      %1003 = vmatpush1.msra.mxu0 %v975
      %1004 = vmatprep.subr.mxu0 0.0
      %1005 = vmatpush1.msra.mxu0 %v976
      %1006 = vmatprep.subr.mxu0 0.0
      %1007 = vmatpush1.msra.mxu0 %v977
      %1008 = vmatprep.subr.mxu0 0.0
      %1009 = vmatpush1.msra.mxu0 %v978
      %1010 = vmatprep.subr.mxu0 0.0
      %1011 = vmatpush1.msra.mxu0 %v979
      %1012 = vmatprep.subr.mxu0 0.0
      %1013 = vmatpush1.msra.mxu0 %v980
      %1014 = vmatprep.subr.mxu0 0.0
      %1015 = vmatpush1.msra.mxu0 %v981
      %1016 = vmatprep.subr.mxu0 0.0
      %1017 = vmatpush1.msra.mxu0 %v982
      %1018 = vmatprep.subr.mxu0 0.0
      %1019 = vmatpush1.msra.mxu0 %v983
      %1020 = vmatprep.subr.mxu0 0.0
      %1021 = vmatpush1.msra.mxu0 %v984
      %1022 = vmatprep.subr.mxu0 0.0
      %1023 = vmatpush1.msra.mxu0 %v985
      %1024 = vmatprep.subr.mxu0 0.0
      %1025 = vmatpush1.msra.mxu0 %v986
      %1026 = vmatprep.subr.mxu0 0.0
      %1027 = vmatpush1.msra.mxu0 0.0
      %1028 = vmatprep.subr.mxu0 0.0
      %1029 = vmatpush1.msra.mxu0 0.0
      %1030 = vmatprep.subr.mxu0 0.0
      %1031 = vmatpush1.msra.mxu0 0.0
      %1032 = vmatprep.subr.mxu0 0.0
      %1033 = vmatpush1.msra.mxu0 0.0
      %1034 = vmatprep.subr.mxu0 0.0
      %1035 = vmatpush1.msra.mxu0 0.0
      %1036 = vmatprep.subr.mxu0 0.0
      %1037 = vmatpush1.msra.mxu0 0.0
      %1038 = vmatprep.subr.mxu0 0.0
      %1039 = vmatpush1.msra.mxu0 0.0
      %1040 = vmatprep.subr.mxu0 0.0
      %1041 = vmatpush1.msra.mxu0 0.0
      %1042 = vmatprep.subr.mxu0 0.0
      %1043 = vmatpush1.msra.mxu0 0.0
      %1044 = vmatprep.subr.mxu0 0.0
      %1045 = vmatpush1.msra.mxu0 0.0
      %1046 = vmatprep.subr.mxu0 0.0
      %1047 = vmatpush1.msra.mxu0 0.0
      %1048 = vmatprep.subr.mxu0 0.0
      %1049 = vmatpush1.msra.mxu0 0.0
      %1050 = vmatprep.subr.mxu0 0.0
      %1051 = vmatpush1.msra.mxu0 0.0
      %1052 = vmatprep.subr.mxu0 0.0
      %1053 = vmatpush1.msra.mxu0 0.0
      %1054 = vmatprep.subr.mxu0 0.0
      %1055 = vmatpush1.msra.mxu0 0.0
      %1056 = vmatprep.subr.mxu0 0.0
      %1057 = vmatpush1.msra.mxu0 0.0
      %1058 = vmatprep.mubr.f32.mxu0 0.0
      %1059 = vmatmul.mubr.f32.gmra.mrb[0].mxu0 %v964
      %v1060 = vpop.f32.mrb[0].mxu0
      %v1061 = vadd.f32 %v992, %v1060
      %v1062 = vpop.f32.mrb[0].mxu0
      %1063 = vdwg.mxu0
      %v1064 = vsel %vm131, %v1061, -inf
      %1065 = vmax.xlane.f32.xlu0 %v1064
      %v1066 = vpop.xlane.xlu0 %1065
      %v1067 = vsub.f32 %v1061, %v1066
      %v1068 = vmul.f32 %v1067, 1.442695
      %v1069 = vpow.pop %v1068
      %v1070 = vsel %vm131, %v1069, 0.0
      %1071 = vadd.xlane.f32.xlu0 %v1070
      %v1072 = vpop.xlane.xlu0 %1071
      %v1073 = vrcp.pop %v1072
      %v1074 = vmul.f32 %v1069, %v1073
      %1075 = vst [vmem:[#allocation17] sm:$0x3] %v1061
      %1076 = vst [vmem:[#allocation18] sm:$0x3] %v1074
      %1077 = vst [vmem:[#allocation20] sm:$0x3] %v964
      %1078 = vst [vmem:[#allocation21] sm:$0x3] %v962
    $region65: #{tpu_custom_call.1} parent=1 // pred_fallthru
      _
    // Predicated region
    $region66: #{tpu_custom_call.1} parent=1 // pred_check
      _
    $region67: #{tpu_custom_call.1} parent=1 // pred_check_branch
      %1080 = sbr.rel (0) target = $region69
    $region68: #{tpu_custom_call.1} parent=1 // pred_region
      %s1082 = ssub.s32 32, 32
      %1083 = vsyncadd [#allocation7], %s1082
      %s1085 = sshll.u32 [#allocation17], 4
      %s1086 = int_to_ptr.vmem [resolvable:$true] %s1085
      %1088 = dma.vmem_to_hbm [thread:$0]  %s1086, 32, %s7, [#allocation7]
    $region69: #{tpu_custom_call.1} parent=1 // pred_fallthru
      _
    // Predicated region
    $region70: #{tpu_custom_call.1} parent=1 // pred_check
      _
    $region71: #{tpu_custom_call.1} parent=1 // pred_check_branch
      %1090 = sbr.rel (0) target = $region73
    $region72: #{tpu_custom_call.1} parent=1 // pred_region
      %s1092 = ssub.s32 32, 32
      %1093 = vsyncadd [#allocation19], %s1092
      %s1095 = sshll.u32 [#allocation18], 4
      %s1096 = int_to_ptr.vmem [resolvable:$true] %s1095
      %1098 = dma.vmem_to_hbm [thread:$0]  %s1096, 32, %s8, [#allocation19]
    $region73: #{tpu_custom_call.1} parent=1 // pred_fallthru
      _
    // Predicated region
    $region74: #{tpu_custom_call.1} parent=1 // pred_check
      _
    $region75: #{tpu_custom_call.1} parent=1 // pred_check_branch
      %1100 = sbr.rel (0) target = $region77
    $region76: #{tpu_custom_call.1} parent=1 // pred_region
      %s1102 = ssub.s32 32, 32
      %1103 = vsyncadd [#allocation19], %s1102
      %s1105 = sshll.u32 [#allocation20], 4
      %s1106 = int_to_ptr.vmem [resolvable:$true] %s1105
      %1108 = dma.vmem_to_hbm [thread:$0]  %s1106, 32, %s9, [#allocation19]
    $region77: #{tpu_custom_call.1} parent=1 // pred_fallthru
      _
    // Predicated region
    $region78: #{tpu_custom_call.1} parent=1 // pred_check
      _
    $region79: #{tpu_custom_call.1} parent=1 // pred_check_branch
      %1110 = sbr.rel (0) target = $region81
    $region80: #{tpu_custom_call.1} parent=1 // pred_region
      %s1112 = ssub.s32 32, 32
      %1113 = vsyncadd [#allocation22], %s1112
      %s1115 = sshll.u32 [#allocation21], 4
      %s1116 = int_to_ptr.vmem [resolvable:$true] %s1115
      %1118 = dma.vmem_to_hbm [thread:$0]  %s1116, 32, %s10, [#allocation22]
    $region81: #{tpu_custom_call.1} parent=1 // pred_fallthru
      _
    // Predicated region
    $region82: #{tpu_custom_call.1} parent=1 // pred_check
      _
    $region83: #{tpu_custom_call.1} parent=1 // pred_check_branch
      %1120 = sbr.rel (0) target = $region85
    $region84: #{tpu_custom_call.1} parent=1 // pred_region
      %1121 = dma.done [#allocation7], 32
    $region85: #{tpu_custom_call.1} parent=1 // pred_fallthru
      _
    // Predicated region
    $region86: #{tpu_custom_call.1} parent=1 // pred_check
      _
    $region87: #{tpu_custom_call.1} parent=1 // pred_check_branch
      %1123 = sbr.rel (0) target = $region89
    $region88: #{tpu_custom_call.1} parent=1 // pred_region
      %1124 = dma.done [#allocation19], 32
    $region89: #{tpu_custom_call.1} parent=1 // pred_fallthru
      _
    // Predicated region
    $region90: #{tpu_custom_call.1} parent=1 // pred_check
      _
    $region91: #{tpu_custom_call.1} parent=1 // pred_check_branch
      %1126 = sbr.rel (0) target = $region93
    $region92: #{tpu_custom_call.1} parent=1 // pred_region
      %1127 = dma.done [#allocation19], 32
    $region93: #{tpu_custom_call.1} parent=1 // pred_fallthru
      _
    // Predicated region
    $region94: #{tpu_custom_call.1} parent=1 // pred_check
      _
    $region95: #{tpu_custom_call.1} parent=1 // pred_check_branch
      %1129 = sbr.rel (0) target = $region97
    $region96: #{tpu_custom_call.1} parent=1 // pred_region
      %1130 = dma.done [#allocation22], 32
    $region97: #{tpu_custom_call.1} parent=1 // pred_fallthru
      _
    %1131 = vsyncpa [#allocation6], 1
    %1132 = vsyncpa [#allocation9], 1
    %1133 = vsyncpa [#allocation12], 1
    %1134 = vsyncpa [#allocation15], 1
    %1135 = vsyncpa [#allocation7], 1
    %1136 = vsyncpa [#allocation19], 1
    %1137 = vsyncpa [#allocation22], 1

</llo_original>
